<compile_context>
chip_gen: v5e
topology: v5e:2x2
jax: 0.10.0
libtpu: 0.0.40
codegen_flags: <defaults>
</compile_context>

<pallas_src>
import jax
import jax.numpy as jnp
from jax.experimental import pallas as pl
from jax.experimental.pallas import tpu as pltpu

CHANNELS = 1024
HIDDEN = 512
N_CLASSES = (168, 11, 7)
N_TOTAL = sum(N_CLASSES)      # 186
N_PAD = 256                   # lane-dense padded head width (multiple of 128)
LEAKY_SLOPE = 0.01


def _head_kernel(h_ref, w1_ref, b1_ref, wh_ref, bh_ref, out_ref):
    # h_ref   : (TB, C)         pooled features, lane-dense, f32
    # w1_ref  : (C, HIDDEN)     lin1 weight, BN-folded, bf16 (resident)
    # b1_ref  : (1, HIDDEN)     lin1 bias, BN-folded, f32   (resident)
    # wh_ref  : (HIDDEN, N_PAD) fused + zero-padded head weights, bf16 (resident)
    # bh_ref  : (1, N_PAD)      fused + zero-padded head biases, f32   (resident)
    # out_ref : (TB, N_PAD)
    h = h_ref[...].astype(jnp.bfloat16)                        # (TB, C)

    # lin1: Linear (+ folded eval-mode BN) -> leaky_relu.  Dropout = identity.
    z = jnp.dot(h, w1_ref[...], preferred_element_type=jnp.float32)
    z = z + b1_ref[...]
    z = jnp.where(z > 0, z, LEAKY_SLOPE * z)                   # leaky_relu(0.01)

    # Fused heads: one MXU matmul over the padded (unmasked) output lanes.
    out = jnp.dot(z.astype(jnp.bfloat16), wh_ref[...],
                  preferred_element_type=jnp.float32)
    out_ref[...] = out + bh_ref[...]


def classifier_head(feat, packed):
    """feat: (B, C, H, W) feature map from the backbone (NCHW, f32 or bf16)."""
    B, C, H, W = feat.shape
    assert C == CHANNELS

    # Global average pool hoisted into XLA on the NCHW tensor (contiguous
    # trailing-dim reduce, single HBM pass).  Accumulate in f32 so bf16
    # backbone features are fine.  The 1/HW scale lives here, not in-kernel.
    pooled = jnp.mean(feat.astype(jnp.float32), axis=(-1, -2))  # (B, C)

    # Batch tiling: pad to a multiple of 8 sublanes; cap the tile so the grid
    # has >= 2 steps for B_pad >= 16 (lets v7x split the parallel batch axis
    # across its two TensorCores) and at 256 rows to amortize per-step cost.
    b_pad8 = ((B + 7) // 8) * 8
    tb = min(256, b_pad8)
    if b_pad8 >= 16:
        tb = min(tb, max(8, (b_pad8 // 2) // 8 * 8))
    B_pad = pl.cdiv(b_pad8, tb) * tb
    if B_pad != B:
        pooled = jnp.pad(pooled, ((0, B_pad - B), (0, 0)))

    grid = (B_pad // tb,)

    cost = pl.CostEstimate(
        flops=2 * B_pad * CHANNELS * HIDDEN + 2 * B_pad * HIDDEN * N_PAD,
        transcendentals=0,
        bytes_accessed=(B_pad * CHANNELS * 4                 # pooled input
                        + CHANNELS * HIDDEN * 2              # w1 (bf16)
                        + HIDDEN * N_PAD * 2                 # wh (bf16)
                        + B_pad * N_PAD * 4                  # out
                        + (HIDDEN + N_PAD) * 4),             # biases
    )

    out = pl.pallas_call(
        _head_kernel,
        out_shape=jax.ShapeDtypeStruct((B_pad, N_PAD), jnp.float32),
        grid=grid,
        in_specs=[
            pl.BlockSpec((tb, CHANNELS), lambda i: (i, 0)),        # pooled tile
            pl.BlockSpec((CHANNELS, HIDDEN), lambda i: (0, 0)),    # w1 resident
            pl.BlockSpec((1, HIDDEN), lambda i: (0, 0)),           # b1 resident
            pl.BlockSpec((HIDDEN, N_PAD), lambda i: (0, 0)),       # wh resident
            pl.BlockSpec((1, N_PAD), lambda i: (0, 0)),            # bh resident
        ],
        out_specs=pl.BlockSpec((tb, N_PAD), lambda i: (i, 0)),
        compiler_params=pltpu.CompilerParams(
            dimension_semantics=("parallel",),
            # Explicit budget: kernel footprint is ~5-6 MiB (2x1 MiB pooled
            # tiles + ~2.6 MiB double-buffered bf16 weights + outputs), so
            # this fits every generation's scoped VMEM (v5e 16 MiB default,
            # v7x 32 MiB of 64 physical) with plenty of headroom.
            vmem_limit_bytes=32 * 1024 * 1024,
        ),
        cost_estimate=cost,
    )(
        pooled,
        packed["w1"], packed["b1"],
        packed["wh"], packed["bh"],
    )

    out = out[:B, :N_TOTAL]
    x1 = out[:, : N_CLASSES[0]]
    x2 = out[:, N_CLASSES[0]: N_CLASSES[0] + N_CLASSES[1]]
    x3 = out[:, N_CLASSES[0] + N_CLASSES[1]:]
    return x1, x2, x3


def init_params(key):
    """Deterministic synthetic f32 parameters with the shapes from __init__."""
    ks = jax.random.split(key, 8)

    def linear_init(kw, kb, fan_in, fan_out):
        bound = 1.0 / jnp.sqrt(fan_in)
        w = jax.random.uniform(kw, (fan_in, fan_out), jnp.float32, -bound, bound)
        b = jax.random.uniform(kb, (1, fan_out), jnp.float32, -bound, bound)
        return w, b

    w1, b1 = linear_init(ks[0], ks[1], CHANNELS, HIDDEN)

    # BatchNorm1d(512) eval-mode params: gamma=1, beta=0, mean=0, var=1
    eps = 1e-5
    gamma = jnp.ones((1, HIDDEN), jnp.float32)
    beta = jnp.zeros((1, HIDDEN), jnp.float32)
    run_mean = jnp.zeros((1, HIDDEN), jnp.float32)
    run_var = jnp.ones((1, HIDDEN), jnp.float32)
    bn_scale = gamma / jnp.sqrt(run_var + eps)
    bn_shift = beta - run_mean * bn_scale

    wh1, bh1 = linear_init(ks[2], ks[3], HIDDEN, N_CLASSES[0])
    wh2, bh2 = linear_init(ks[4], ks[5], HIDDEN, N_CLASSES[1])
    wh3, bh3 = linear_init(ks[6], ks[7], HIDDEN, N_CLASSES[2])

    wh = jnp.concatenate([wh1, wh2, wh3], axis=1)      # (512, 186)
    bh = jnp.concatenate([bh1, bh2, bh3], axis=1)      # (1, 186)

    return {"w1": w1, "b1": b1, "bn_scale": bn_scale, "bn_shift": bn_shift,
            "wh": wh, "bh": bh}


def pack_params(raw):
    """Fold BN into lin1 (exact, in f32), pad fused heads to N_PAD, cast to bf16."""
    w1 = (raw["w1"] * raw["bn_scale"]).astype(jnp.bfloat16)          # (1024, 512)
    b1 = raw["b1"] * raw["bn_scale"] + raw["bn_shift"]               # (1, 512) f32
    wh = jnp.pad(raw["wh"], ((0, 0), (0, N_PAD - N_TOTAL))).astype(jnp.bfloat16)
    bh = jnp.pad(raw["bh"], ((0, 0), (0, N_PAD - N_TOTAL)))          # (1, 256) f32
    return {"w1": w1, "b1": b1, "wh": wh, "bh": bh}


def reference(feat, raw):
    """Pure-JAX f32 reference of the same head (unfolded BN), for sanity check."""
    h = jnp.mean(feat, axis=(-1, -2))
    z = h @ raw["w1"] + raw["b1"]
    z = z * raw["bn_scale"] + raw["bn_shift"]
    z = jnp.where(z > 0, z, LEAKY_SLOPE * z)
    out = z @ raw["wh"] + raw["bh"]
    return (out[:, :N_CLASSES[0]],
            out[:, N_CLASSES[0]:N_CLASSES[0] + N_CLASSES[1]],
            out[:, N_CLASSES[0] + N_CLASSES[1]:])


if __name__ == "__main__":
    key = jax.random.PRNGKey(0)
    k_feat, k_param = jax.random.split(key)

    # Small, forward-consistent shapes: batch=2, C=1024 (densenet121 feature
    # channels), 4x4 spatial feature map.
    B, H, W = 2, 4, 4
    feat = jax.random.normal(k_feat, (B, CHANNELS, H, W), jnp.float32)
    raw = init_params(k_param)
    packed = pack_params(raw)

    x1, x2, x3 = classifier_head(feat, packed)
    jax.block_until_ready((x1, x2, x3))

    r1, r2, r3 = reference(feat, raw)
    assert x1.shape == (B, 168) and x2.shape == (B, 11) and x3.shape == (B, 7)
    # bf16 weights/activations in the kernel vs f32 reference -> loose tolerance.
    assert jnp.allclose(x1, r1, atol=1e-2, rtol=1e-2)
    assert jnp.allclose(x2, r2, atol=1e-2, rtol=1e-2)
    assert jnp.allclose(x3, r3, atol=1e-2, rtol=1e-2)

    print("KERNEL_OK")
</pallas_src>

<mosaic_0001>
module attributes {stable_mosaic.version = 11 : i64} {
  func.func @_head_kernel(%arg0: i32, %arg1: memref<8x1024xf32, #tpu.memory_space<vmem>>, %arg2: memref<1024x512xbf16, #tpu.memory_space<vmem>>, %arg3: memref<1x512xf32, #tpu.memory_space<vmem>>, %arg4: memref<512x256xbf16, #tpu.memory_space<vmem>>, %arg5: memref<1x256xf32, #tpu.memory_space<vmem>>, %arg6: memref<8x256xf32, #tpu.memory_space<vmem>>) attributes {dimension_semantics = [#tpu.dimension_semantics<parallel>], iteration_bounds = array<i64: 1>, scalar_prefetch = 0 : i64, scratch_operands = 0 : i64, tpu.core_type = #tpu.core_type<tc>, window_params = [{transform_indices = @transform_0, window_bounds = array<i64: 8, 1024>}, {pipeline_mode = #tpu.pipeline_mode<synchronous>, transform_indices = @transform_1, window_bounds = array<i64: 1024, 512>}, {pipeline_mode = #tpu.pipeline_mode<synchronous>, transform_indices = @transform_2, window_bounds = array<i64: 1, 512>}, {pipeline_mode = #tpu.pipeline_mode<synchronous>, transform_indices = @transform_3, window_bounds = array<i64: 512, 256>}, {pipeline_mode = #tpu.pipeline_mode<synchronous>, transform_indices = @transform_4, window_bounds = array<i64: 1, 256>}, {transform_indices = @transform_5, window_bounds = array<i64: 8, 256>}]} {
    %c0 = arith.constant 0 : index
    %c0_0 = arith.constant 0 : index
    %0 = vector.load %arg1[%c0, %c0_0] : memref<8x1024xf32, #tpu.memory_space<vmem>>, vector<8x1024xf32>
    %1 = arith.truncf %0 : vector<8x1024xf32> to vector<8x1024xbf16>
    %c0_1 = arith.constant 0 : index
    %c0_2 = arith.constant 0 : index
    %2 = vector.load %arg2[%c0_1, %c0_2] : memref<1024x512xbf16, #tpu.memory_space<vmem>>, vector<1024x512xbf16>
    %cst = arith.constant dense<0.000000e+00> : vector<8x512xf32>
    %3 = tpu.matmul %1, %2, %cst {dimension_numbers = #tpu.dot_dimension_numbers<[1], [0], [0], [1], [0, 0, 1, 1], [], []>} : vector<8x1024xbf16>, vector<1024x512xbf16>, vector<8x512xf32> -> vector<8x512xf32>
    %c0_3 = arith.constant 0 : index
    %c0_4 = arith.constant 0 : index
    %4 = vector.load %arg3[%c0_3, %c0_4] : memref<1x512xf32, #tpu.memory_space<vmem>>, vector<1x512xf32>
    %5 = vector.broadcast %4 : vector<1x512xf32> to vector<8x512xf32>
    %6 = arith.addf %3, %5 : vector<8x512xf32>
    %cst_5 = arith.constant 0.000000e+00 : f32
    %7 = vector.broadcast %cst_5 : f32 to vector<8x512xf32>
    %8 = arith.cmpf ogt, %6, %7 : vector<8x512xf32>
    %cst_6 = arith.constant 0.00999999977 : f32
    %9 = vector.broadcast %cst_6 : f32 to vector<8x512xf32>
    %10 = arith.mulf %9, %6 : vector<8x512xf32>
    %11 = arith.select %8, %6, %10 : vector<8x512xi1>, vector<8x512xf32>
    %12 = arith.truncf %11 : vector<8x512xf32> to vector<8x512xbf16>
    %c0_7 = arith.constant 0 : index
    %c0_8 = arith.constant 0 : index
    %13 = vector.load %arg4[%c0_7, %c0_8] : memref<512x256xbf16, #tpu.memory_space<vmem>>, vector<512x256xbf16>
    %cst_9 = arith.constant dense<0.000000e+00> : vector<8x256xf32>
    %14 = tpu.matmul %12, %13, %cst_9 {dimension_numbers = #tpu.dot_dimension_numbers<[1], [0], [0], [1], [0, 0, 1, 1], [], []>} : vector<8x512xbf16>, vector<512x256xbf16>, vector<8x256xf32> -> vector<8x256xf32>
    %c0_10 = arith.constant 0 : index
    %c0_11 = arith.constant 0 : index
    %15 = vector.load %arg5[%c0_10, %c0_11] : memref<1x256xf32, #tpu.memory_space<vmem>>, vector<1x256xf32>
    %16 = vector.broadcast %15 : vector<1x256xf32> to vector<8x256xf32>
    %17 = arith.addf %14, %16 : vector<8x256xf32>
    %c0_12 = arith.constant 0 : index
    %c0_13 = arith.constant 0 : index
    %18 = vector.load %arg6[%c0_12, %c0_13] : memref<8x256xf32, #tpu.memory_space<vmem>>, vector<8x256xf32>
    tpu.vector_store %arg6[%c0_12, %c0_13], %17 {strides = array<i32>} : memref<8x256xf32, #tpu.memory_space<vmem>>, vector<8x256xf32>,
    return
  }
  func.func @transform_0(%arg0: i32) -> (i32, i32) {
    %c0_i32 = arith.constant 0 : i32
    %c0_i32_0 = arith.constant 0 : i32
    return %arg0, %c0_i32 : i32, i32
  }
  func.func @transform_1(%arg0: i32) -> (i32, i32) {
    %c0_i32 = arith.constant 0 : i32
    %c0_i32_0 = arith.constant 0 : i32
    %c0_i32_1 = arith.constant 0 : i32
    return %c0_i32, %c0_i32_0 : i32, i32
  }
  func.func @transform_2(%arg0: i32) -> (i32, i32) {
    %c0_i32 = arith.constant 0 : i32
    %c0_i32_0 = arith.constant 0 : i32
    %c0_i32_1 = arith.constant 0 : i32
    return %c0_i32, %c0_i32_0 : i32, i32
  }
  func.func @transform_3(%arg0: i32) -> (i32, i32) {
    %c0_i32 = arith.constant 0 : i32
    %c0_i32_0 = arith.constant 0 : i32
    %c0_i32_1 = arith.constant 0 : i32
    return %c0_i32, %c0_i32_0 : i32, i32
  }
  func.func @transform_4(%arg0: i32) -> (i32, i32) {
    %c0_i32 = arith.constant 0 : i32
    %c0_i32_0 = arith.constant 0 : i32
    %c0_i32_1 = arith.constant 0 : i32
    return %c0_i32, %c0_i32_0 : i32, i32
  }
  func.func @transform_5(%arg0: i32) -> (i32, i32) {
    %c0_i32 = arith.constant 0 : i32
    %c0_i32_0 = arith.constant 0 : i32
    return %arg0, %c0_i32 : i32, i32
  }
}

</mosaic_0001>

<llo_original>
// kernel: tpu_custom_call.1
$region0: #{tpu_custom_call.1}
  #allocation0 [shape = 'u32[]', space=smem, size = 0x4, offset = 0x4, fixed_abs, tag = 'smem constant byte address 0x4 - core index']
  #allocation1 [shape = 'u32[72,128]{1,0:T(1,128)}', space=vmem, size = 0x9000, scoped, tag = 'internal scratch']
  %s0 = inlined_call_operand.hbm [shape: f32[8,1024], index: 0, kind: input, shape index: {}]
  %s1 = inlined_call_operand.hbm [shape: bf16[1024,512], index: 1, kind: input, shape index: {}]
  %s2 = inlined_call_operand.hbm [shape: f32[1,512], index: 2, kind: input, shape index: {}]
  %s3 = inlined_call_operand.hbm [shape: bf16[512,256], index: 3, kind: input, shape index: {}]
  %s4 = inlined_call_operand.vmem [shape: f32[1,256], index: 4, kind: input, shape index: {}]
  %s5 = inlined_call_operand.hbm [shape: f32[8,256], index: 5, kind: output, shape index: {}]
  %s6 = sld [smem:[#allocation0]]
  $region46: #{tpu_custom_call.1} parent=0
    _
  %s8 = ssub.s32 1, %s6
  %s9 = scalar_select 0, %s8, %s6
  $region1: #{tpu_custom_call.1} parent=0
    #allocation2 [shape = 'u8[32768]{0}', space=vmem, size = 0x8000, scoped, tag = 'input window, operand 0, single buffered']
    #allocation3 [shape = 's32[1]{0}', space=sflag, size = 0x4, scoped, tag = 'scoped memory for tpu_custom_call.1']
    #allocation4 [shape = 's32[1]{0}', space=sflag, size = 0x4, scoped, tag = 'scoped memory for tpu_custom_call.1']
    #allocation5 [shape = 'u8[1048576]{0}', space=vmem, size = 0x100000, scoped, tag = 'input window, operand 1, single buffered']
    #allocation6 [shape = 's32[1]{0}', space=sflag, size = 0x4, scoped, tag = 'scoped memory for tpu_custom_call.1']
    #allocation7 [shape = 'u8[2048]{0}', space=vmem, size = 0x800, scoped, tag = 'input window, operand 2, single buffered']
    #allocation8 [shape = 'u8[262144]{0}', space=vmem, size = 0x40000, scoped, tag = 'input window, operand 3, single buffered']
    #allocation9 [shape = 's32[1]{0}', space=sflag, size = 0x4, scoped, tag = 'scoped memory for tpu_custom_call.1']
    #allocation10 [shape = 'u8[8192]{0}', space=vmem, size = 0x2000, scoped, tag = 'output window, operand 0, single buffered']
    %10 = vsyncpa [#allocation3], 0
    %11 = vsyncpa [#allocation6], 0
    %12 = vsyncpa [#allocation9], 0
    %13 = vsyncpa [#allocation4], 0
    // Predicated region
    $region2: #{tpu_custom_call.1} parent=1 // pred_check
      _
    $region3: #{tpu_custom_call.1} parent=1 // pred_check_branch
      %15 = sbr.rel (0) target = $region5
    $region4: #{tpu_custom_call.1} parent=1 // pred_region
      %17 = vsyncadd [#allocation3], 0
      %s19 = sshll.u32 %s0, 4
      %s20 = int_to_ptr.hbm [resolvable:$true] %s19
      %s21 = sshll.u32 [#allocation2], 4
      %s22 = int_to_ptr.vmem [resolvable:$true] %s21
      %24 = dma.hbm_to_vmem [thread:$0]  %s20, 1024, %s22, [#allocation3]
    $region5: #{tpu_custom_call.1} parent=1 // pred_fallthru
      _
    // Predicated region
    $region6: #{tpu_custom_call.1} parent=1 // pred_check
      _
    $region7: #{tpu_custom_call.1} parent=1 // pred_check_branch
      %26 = sbr.rel (0) target = $region9
    $region8: #{tpu_custom_call.1} parent=1 // pred_region
      %28 = vsyncadd [#allocation6], 0
      %s29 = sshll.u32 %s1, 4
      %s30 = int_to_ptr.hbm [resolvable:$true] %s29
      %s31 = sshll.u32 [#allocation5], 4
      %s32 = int_to_ptr.vmem [resolvable:$true] %s31
      %37 = dma.hbm_to_vmem [thread:$0]  %s30, 32768, %s32, [#allocation6], 256, 256, 16
    $region9: #{tpu_custom_call.1} parent=1 // pred_fallthru
      _
    // Predicated region
    $region10: #{tpu_custom_call.1} parent=1 // pred_check
      _
    $region11: #{tpu_custom_call.1} parent=1 // pred_check_branch
      %39 = sbr.rel (0) target = $region13
    $region12: #{tpu_custom_call.1} parent=1 // pred_region
      %41 = vsyncadd [#allocation6], 0
      %s43 = sshll.u32 %s2, 4
      %s44 = int_to_ptr.hbm [resolvable:$true] %s43
      %s45 = sshll.u32 [#allocation7], 4
      %s46 = int_to_ptr.vmem [resolvable:$true] %s45
      %48 = dma.hbm_to_vmem [thread:$0]  %s44, 64, %s46, [#allocation6]
    $region13: #{tpu_custom_call.1} parent=1 // pred_fallthru
      _
    // Predicated region
    $region14: #{tpu_custom_call.1} parent=1 // pred_check
      _
    $region15: #{tpu_custom_call.1} parent=1 // pred_check_branch
      %50 = sbr.rel (0) target = $region17
    $region16: #{tpu_custom_call.1} parent=1 // pred_region
      %52 = vsyncadd [#allocation9], 0
      %s53 = sshll.u32 %s3, 4
      %s54 = int_to_ptr.hbm [resolvable:$true] %s53
      %s55 = sshll.u32 [#allocation8], 4
      %s56 = int_to_ptr.vmem [resolvable:$true] %s55
      %61 = dma.hbm_to_vmem [thread:$0]  %s54, 8192, %s56, [#allocation9], 128, 128, 8
    $region17: #{tpu_custom_call.1} parent=1 // pred_fallthru
      _
    // Predicated region
    $region18: #{tpu_custom_call.1} parent=1 // pred_check
      _
    $region19: #{tpu_custom_call.1} parent=1 // pred_check_branch
      %63 = sbr.rel (0) target = $region21
    $region20: #{tpu_custom_call.1} parent=1 // pred_region
      _
    $region21: #{tpu_custom_call.1} parent=1 // pred_fallthru
      _
    // Predicated region
    $region22: #{tpu_custom_call.1} parent=1 // pred_check
      _
    $region23: #{tpu_custom_call.1} parent=1 // pred_check_branch
      %65 = sbr.rel (0) target = $region25
    $region24: #{tpu_custom_call.1} parent=1 // pred_region
      %67 = dma.done [#allocation3], 1024
    $region25: #{tpu_custom_call.1} parent=1 // pred_fallthru
      _
    // Predicated region
    $region26: #{tpu_custom_call.1} parent=1 // pred_check
      _
    $region27: #{tpu_custom_call.1} parent=1 // pred_check_branch
      %69 = sbr.rel (0) target = $region29
    $region28: #{tpu_custom_call.1} parent=1 // pred_region
      %71 = dma.done [#allocation6], 32768
    $region29: #{tpu_custom_call.1} parent=1 // pred_fallthru
      _
    // Predicated region
    $region30: #{tpu_custom_call.1} parent=1 // pred_check
      _
    $region31: #{tpu_custom_call.1} parent=1 // pred_check_branch
      %73 = sbr.rel (0) target = $region33
    $region32: #{tpu_custom_call.1} parent=1 // pred_region
      %75 = dma.done [#allocation6], 64
    $region33: #{tpu_custom_call.1} parent=1 // pred_fallthru
      _
    // Predicated region
    $region34: #{tpu_custom_call.1} parent=1 // pred_check
      _
    $region35: #{tpu_custom_call.1} parent=1 // pred_check_branch
      %77 = sbr.rel (0) target = $region37
    $region36: #{tpu_custom_call.1} parent=1 // pred_region
      %79 = dma.done [#allocation9], 8192
    $region37: #{tpu_custom_call.1} parent=1 // pred_fallthru
      _
    %v80 = vld [vmem:[#allocation2] sm:$0xff]
    %v81 = vld [vmem:[#allocation2 + $0x8] sm:$0xff]
    %v82 = vld [vmem:[#allocation2 + $0x10] sm:$0xff]
    %v83 = vld [vmem:[#allocation2 + $0x18] sm:$0xff]
    %v84 = vld [vmem:[#allocation2 + $0x20] sm:$0xff]
    %v85 = vld [vmem:[#allocation2 + $0x28] sm:$0xff]
    %v86 = vld [vmem:[#allocation2 + $0x30] sm:$0xff]
    %v87 = vld [vmem:[#allocation2 + $0x38] sm:$0xff]
    %v88 = vpack.c.bf16 %v80, %v80
    %v89 = vpack.c.bf16 %v81, %v81
    %v90 = vpack.c.bf16 %v82, %v82
    %v91 = vpack.c.bf16 %v83, %v83
    %v92 = vpack.c.bf16 %v84, %v84
    %v93 = vpack.c.bf16 %v85, %v85
    %v94 = vpack.c.bf16 %v86, %v86
    %v95 = vpack.c.bf16 %v87, %v87
    %v96 = vld [vmem:[#allocation5] sm:$0xff]
    %v97 = vld [vmem:[#allocation5 + $0x8] sm:$0xff]
    %v98 = vld [vmem:[#allocation5 + $0x10] sm:$0xff]
    %v99 = vld [vmem:[#allocation5 + $0x18] sm:$0xff]
    %v100 = vld [vmem:[#allocation5 + $0x20] sm:$0xff]
    %v101 = vld [vmem:[#allocation5 + $0x28] sm:$0xff]
    %v102 = vld [vmem:[#allocation5 + $0x30] sm:$0xff]
    %v103 = vld [vmem:[#allocation5 + $0x38] sm:$0xff]
    %v104 = vld [vmem:[#allocation5 + $0x40] sm:$0xff]
    %v105 = vld [vmem:[#allocation5 + $0x48] sm:$0xff]
    %v106 = vld [vmem:[#allocation5 + $0x50] sm:$0xff]
    %v107 = vld [vmem:[#allocation5 + $0x58] sm:$0xff]
    %v108 = vld [vmem:[#allocation5 + $0x60] sm:$0xff]
    %v109 = vld [vmem:[#allocation5 + $0x68] sm:$0xff]
    %v110 = vld [vmem:[#allocation5 + $0x70] sm:$0xff]
    %v111 = vld [vmem:[#allocation5 + $0x78] sm:$0xff]
    %v112 = vld [vmem:[#allocation5 + $0x80] sm:$0xff]
    %v113 = vld [vmem:[#allocation5 + $0x88] sm:$0xff]
    %v114 = vld [vmem:[#allocation5 + $0x90] sm:$0xff]
    %v115 = vld [vmem:[#allocation5 + $0x98] sm:$0xff]
    %v116 = vld [vmem:[#allocation5 + $0xa0] sm:$0xff]
    %v117 = vld [vmem:[#allocation5 + $0xa8] sm:$0xff]
    %v118 = vld [vmem:[#allocation5 + $0xb0] sm:$0xff]
    %v119 = vld [vmem:[#allocation5 + $0xb8] sm:$0xff]
    %v120 = vld [vmem:[#allocation5 + $0xc0] sm:$0xff]
    %v121 = vld [vmem:[#allocation5 + $0xc8] sm:$0xff]
    %v122 = vld [vmem:[#allocation5 + $0xd0] sm:$0xff]
    %v123 = vld [vmem:[#allocation5 + $0xd8] sm:$0xff]
    %v124 = vld [vmem:[#allocation5 + $0xe0] sm:$0xff]
    %v125 = vld [vmem:[#allocation5 + $0xe8] sm:$0xff]
    %v126 = vld [vmem:[#allocation5 + $0xf0] sm:$0xff]
    %v127 = vld [vmem:[#allocation5 + $0xf8] sm:$0xff]
    %v128 = vld [vmem:[#allocation5 + $0x100] sm:$0xff]
    %v129 = vld [vmem:[#allocation5 + $0x108] sm:$0xff]
    %v130 = vld [vmem:[#allocation5 + $0x110] sm:$0xff]
    %v131 = vld [vmem:[#allocation5 + $0x118] sm:$0xff]
    %v132 = vld [vmem:[#allocation5 + $0x120] sm:$0xff]
    %v133 = vld [vmem:[#allocation5 + $0x128] sm:$0xff]
    %v134 = vld [vmem:[#allocation5 + $0x130] sm:$0xff]
    %v135 = vld [vmem:[#allocation5 + $0x138] sm:$0xff]
    %v136 = vld [vmem:[#allocation5 + $0x140] sm:$0xff]
    %v137 = vld [vmem:[#allocation5 + $0x148] sm:$0xff]
    %v138 = vld [vmem:[#allocation5 + $0x150] sm:$0xff]
    %v139 = vld [vmem:[#allocation5 + $0x158] sm:$0xff]
    %v140 = vld [vmem:[#allocation5 + $0x160] sm:$0xff]
    %v141 = vld [vmem:[#allocation5 + $0x168] sm:$0xff]
    %v142 = vld [vmem:[#allocation5 + $0x170] sm:$0xff]
    %v143 = vld [vmem:[#allocation5 + $0x178] sm:$0xff]
    %v144 = vld [vmem:[#allocation5 + $0x180] sm:$0xff]
    %v145 = vld [vmem:[#allocation5 + $0x188] sm:$0xff]
    %v146 = vld [vmem:[#allocation5 + $0x190] sm:$0xff]
    %v147 = vld [vmem:[#allocation5 + $0x198] sm:$0xff]
    %v148 = vld [vmem:[#allocation5 + $0x1a0] sm:$0xff]
    %v149 = vld [vmem:[#allocation5 + $0x1a8] sm:$0xff]
    %v150 = vld [vmem:[#allocation5 + $0x1b0] sm:$0xff]
    %v151 = vld [vmem:[#allocation5 + $0x1b8] sm:$0xff]
    %v152 = vld [vmem:[#allocation5 + $0x1c0] sm:$0xff]
    %v153 = vld [vmem:[#allocation5 + $0x1c8] sm:$0xff]
    %v154 = vld [vmem:[#allocation5 + $0x1d0] sm:$0xff]
    %v155 = vld [vmem:[#allocation5 + $0x1d8] sm:$0xff]
    %v156 = vld [vmem:[#allocation5 + $0x1e0] sm:$0xff]
    %v157 = vld [vmem:[#allocation5 + $0x1e8] sm:$0xff]
    %v158 = vld [vmem:[#allocation5 + $0x1f0] sm:$0xff]
    %v159 = vld [vmem:[#allocation5 + $0x1f8] sm:$0xff]
    %v160 = vld [vmem:[#allocation5 + $0x200] sm:$0xff]
    %v161 = vld [vmem:[#allocation5 + $0x208] sm:$0xff]
    %v162 = vld [vmem:[#allocation5 + $0x210] sm:$0xff]
    %v163 = vld [vmem:[#allocation5 + $0x218] sm:$0xff]
    %v164 = vld [vmem:[#allocation5 + $0x220] sm:$0xff]
    %v165 = vld [vmem:[#allocation5 + $0x228] sm:$0xff]
    %v166 = vld [vmem:[#allocation5 + $0x230] sm:$0xff]
    %v167 = vld [vmem:[#allocation5 + $0x238] sm:$0xff]
    %v168 = vld [vmem:[#allocation5 + $0x240] sm:$0xff]
    %v169 = vld [vmem:[#allocation5 + $0x248] sm:$0xff]
    %v170 = vld [vmem:[#allocation5 + $0x250] sm:$0xff]
    %v171 = vld [vmem:[#allocation5 + $0x258] sm:$0xff]
    %v172 = vld [vmem:[#allocation5 + $0x260] sm:$0xff]
    %v173 = vld [vmem:[#allocation5 + $0x268] sm:$0xff]
    %v174 = vld [vmem:[#allocation5 + $0x270] sm:$0xff]
    %v175 = vld [vmem:[#allocation5 + $0x278] sm:$0xff]
    %v176 = vld [vmem:[#allocation5 + $0x280] sm:$0xff]
    %v177 = vld [vmem:[#allocation5 + $0x288] sm:$0xff]
    %v178 = vld [vmem:[#allocation5 + $0x290] sm:$0xff]
    %v179 = vld [vmem:[#allocation5 + $0x298] sm:$0xff]
    %v180 = vld [vmem:[#allocation5 + $0x2a0] sm:$0xff]
    %v181 = vld [vmem:[#allocation5 + $0x2a8] sm:$0xff]
    %v182 = vld [vmem:[#allocation5 + $0x2b0] sm:$0xff]
    %v183 = vld [vmem:[#allocation5 + $0x2b8] sm:$0xff]
    %v184 = vld [vmem:[#allocation5 + $0x2c0] sm:$0xff]
    %v185 = vld [vmem:[#allocation5 + $0x2c8] sm:$0xff]
    %v186 = vld [vmem:[#allocation5 + $0x2d0] sm:$0xff]
    %v187 = vld [vmem:[#allocation5 + $0x2d8] sm:$0xff]
    %v188 = vld [vmem:[#allocation5 + $0x2e0] sm:$0xff]
    %v189 = vld [vmem:[#allocation5 + $0x2e8] sm:$0xff]
    %v190 = vld [vmem:[#allocation5 + $0x2f0] sm:$0xff]
    %v191 = vld [vmem:[#allocation5 + $0x2f8] sm:$0xff]
    %v192 = vld [vmem:[#allocation5 + $0x300] sm:$0xff]
    %v193 = vld [vmem:[#allocation5 + $0x308] sm:$0xff]
    %v194 = vld [vmem:[#allocation5 + $0x310] sm:$0xff]
    %v195 = vld [vmem:[#allocation5 + $0x318] sm:$0xff]
    %v196 = vld [vmem:[#allocation5 + $0x320] sm:$0xff]
    %v197 = vld [vmem:[#allocation5 + $0x328] sm:$0xff]
    %v198 = vld [vmem:[#allocation5 + $0x330] sm:$0xff]
    %v199 = vld [vmem:[#allocation5 + $0x338] sm:$0xff]
    %v200 = vld [vmem:[#allocation5 + $0x340] sm:$0xff]
    %v201 = vld [vmem:[#allocation5 + $0x348] sm:$0xff]
    %v202 = vld [vmem:[#allocation5 + $0x350] sm:$0xff]
    %v203 = vld [vmem:[#allocation5 + $0x358] sm:$0xff]
    %v204 = vld [vmem:[#allocation5 + $0x360] sm:$0xff]
    %v205 = vld [vmem:[#allocation5 + $0x368] sm:$0xff]
    %v206 = vld [vmem:[#allocation5 + $0x370] sm:$0xff]
    %v207 = vld [vmem:[#allocation5 + $0x378] sm:$0xff]
    %v208 = vld [vmem:[#allocation5 + $0x380] sm:$0xff]
    %v209 = vld [vmem:[#allocation5 + $0x388] sm:$0xff]
    %v210 = vld [vmem:[#allocation5 + $0x390] sm:$0xff]
    %v211 = vld [vmem:[#allocation5 + $0x398] sm:$0xff]
    %v212 = vld [vmem:[#allocation5 + $0x3a0] sm:$0xff]
    %v213 = vld [vmem:[#allocation5 + $0x3a8] sm:$0xff]
    %v214 = vld [vmem:[#allocation5 + $0x3b0] sm:$0xff]
    %v215 = vld [vmem:[#allocation5 + $0x3b8] sm:$0xff]
    %v216 = vld [vmem:[#allocation5 + $0x3c0] sm:$0xff]
    %v217 = vld [vmem:[#allocation5 + $0x3c8] sm:$0xff]
    %v218 = vld [vmem:[#allocation5 + $0x3d0] sm:$0xff]
    %v219 = vld [vmem:[#allocation5 + $0x3d8] sm:$0xff]
    %v220 = vld [vmem:[#allocation5 + $0x3e0] sm:$0xff]
    %v221 = vld [vmem:[#allocation5 + $0x3e8] sm:$0xff]
    %v222 = vld [vmem:[#allocation5 + $0x3f0] sm:$0xff]
    %v223 = vld [vmem:[#allocation5 + $0x3f8] sm:$0xff]
    %v224 = vld [vmem:[#allocation5 + $0x400] sm:$0xff]
    %v225 = vld [vmem:[#allocation5 + $0x408] sm:$0xff]
    %v226 = vld [vmem:[#allocation5 + $0x410] sm:$0xff]
    %v227 = vld [vmem:[#allocation5 + $0x418] sm:$0xff]
    %v228 = vld [vmem:[#allocation5 + $0x420] sm:$0xff]
    %v229 = vld [vmem:[#allocation5 + $0x428] sm:$0xff]
    %v230 = vld [vmem:[#allocation5 + $0x430] sm:$0xff]
    %v231 = vld [vmem:[#allocation5 + $0x438] sm:$0xff]
    %v232 = vld [vmem:[#allocation5 + $0x440] sm:$0xff]
    %v233 = vld [vmem:[#allocation5 + $0x448] sm:$0xff]
    %v234 = vld [vmem:[#allocation5 + $0x450] sm:$0xff]
    %v235 = vld [vmem:[#allocation5 + $0x458] sm:$0xff]
    %v236 = vld [vmem:[#allocation5 + $0x460] sm:$0xff]
    %v237 = vld [vmem:[#allocation5 + $0x468] sm:$0xff]
    %v238 = vld [vmem:[#allocation5 + $0x470] sm:$0xff]
    %v239 = vld [vmem:[#allocation5 + $0x478] sm:$0xff]
    %v240 = vld [vmem:[#allocation5 + $0x480] sm:$0xff]
    %v241 = vld [vmem:[#allocation5 + $0x488] sm:$0xff]
    %v242 = vld [vmem:[#allocation5 + $0x490] sm:$0xff]
    %v243 = vld [vmem:[#allocation5 + $0x498] sm:$0xff]
    %v244 = vld [vmem:[#allocation5 + $0x4a0] sm:$0xff]
    %v245 = vld [vmem:[#allocation5 + $0x4a8] sm:$0xff]
    %v246 = vld [vmem:[#allocation5 + $0x4b0] sm:$0xff]
    %v247 = vld [vmem:[#allocation5 + $0x4b8] sm:$0xff]
    %v248 = vld [vmem:[#allocation5 + $0x4c0] sm:$0xff]
    %v249 = vld [vmem:[#allocation5 + $0x4c8] sm:$0xff]
    %v250 = vld [vmem:[#allocation5 + $0x4d0] sm:$0xff]
    %v251 = vld [vmem:[#allocation5 + $0x4d8] sm:$0xff]
    %v252 = vld [vmem:[#allocation5 + $0x4e0] sm:$0xff]
    %v253 = vld [vmem:[#allocation5 + $0x4e8] sm:$0xff]
    %v254 = vld [vmem:[#allocation5 + $0x4f0] sm:$0xff]
    %v255 = vld [vmem:[#allocation5 + $0x4f8] sm:$0xff]
    %v256 = vld [vmem:[#allocation5 + $0x500] sm:$0xff]
    %v257 = vld [vmem:[#allocation5 + $0x508] sm:$0xff]
    %v258 = vld [vmem:[#allocation5 + $0x510] sm:$0xff]
    %v259 = vld [vmem:[#allocation5 + $0x518] sm:$0xff]
    %v260 = vld [vmem:[#allocation5 + $0x520] sm:$0xff]
    %v261 = vld [vmem:[#allocation5 + $0x528] sm:$0xff]
    %v262 = vld [vmem:[#allocation5 + $0x530] sm:$0xff]
    %v263 = vld [vmem:[#allocation5 + $0x538] sm:$0xff]
    %v264 = vld [vmem:[#allocation5 + $0x540] sm:$0xff]
    %v265 = vld [vmem:[#allocation5 + $0x548] sm:$0xff]
    %v266 = vld [vmem:[#allocation5 + $0x550] sm:$0xff]
    %v267 = vld [vmem:[#allocation5 + $0x558] sm:$0xff]
    %v268 = vld [vmem:[#allocation5 + $0x560] sm:$0xff]
    %v269 = vld [vmem:[#allocation5 + $0x568] sm:$0xff]
    %v270 = vld [vmem:[#allocation5 + $0x570] sm:$0xff]
    %v271 = vld [vmem:[#allocation5 + $0x578] sm:$0xff]
    %v272 = vld [vmem:[#allocation5 + $0x580] sm:$0xff]
    %v273 = vld [vmem:[#allocation5 + $0x588] sm:$0xff]
    %v274 = vld [vmem:[#allocation5 + $0x590] sm:$0xff]
    %v275 = vld [vmem:[#allocation5 + $0x598] sm:$0xff]
    %v276 = vld [vmem:[#allocation5 + $0x5a0] sm:$0xff]
    %v277 = vld [vmem:[#allocation5 + $0x5a8] sm:$0xff]
    %v278 = vld [vmem:[#allocation5 + $0x5b0] sm:$0xff]
    %v279 = vld [vmem:[#allocation5 + $0x5b8] sm:$0xff]
    %v280 = vld [vmem:[#allocation5 + $0x5c0] sm:$0xff]
    %v281 = vld [vmem:[#allocation5 + $0x5c8] sm:$0xff]
    %v282 = vld [vmem:[#allocation5 + $0x5d0] sm:$0xff]
    %v283 = vld [vmem:[#allocation5 + $0x5d8] sm:$0xff]
    %v284 = vld [vmem:[#allocation5 + $0x5e0] sm:$0xff]
    %v285 = vld [vmem:[#allocation5 + $0x5e8] sm:$0xff]
    %v286 = vld [vmem:[#allocation5 + $0x5f0] sm:$0xff]
    %v287 = vld [vmem:[#allocation5 + $0x5f8] sm:$0xff]
    %v288 = vld [vmem:[#allocation5 + $0x600] sm:$0xff]
    %v289 = vld [vmem:[#allocation5 + $0x608] sm:$0xff]
    %v290 = vld [vmem:[#allocation5 + $0x610] sm:$0xff]
    %v291 = vld [vmem:[#allocation5 + $0x618] sm:$0xff]
    %v292 = vld [vmem:[#allocation5 + $0x620] sm:$0xff]
    %v293 = vld [vmem:[#allocation5 + $0x628] sm:$0xff]
    %v294 = vld [vmem:[#allocation5 + $0x630] sm:$0xff]
    %v295 = vld [vmem:[#allocation5 + $0x638] sm:$0xff]
    %v296 = vld [vmem:[#allocation5 + $0x640] sm:$0xff]
    %v297 = vld [vmem:[#allocation5 + $0x648] sm:$0xff]
    %v298 = vld [vmem:[#allocation5 + $0x650] sm:$0xff]
    %v299 = vld [vmem:[#allocation5 + $0x658] sm:$0xff]
    %v300 = vld [vmem:[#allocation5 + $0x660] sm:$0xff]
    %v301 = vld [vmem:[#allocation5 + $0x668] sm:$0xff]
    %v302 = vld [vmem:[#allocation5 + $0x670] sm:$0xff]
    %v303 = vld [vmem:[#allocation5 + $0x678] sm:$0xff]
    %v304 = vld [vmem:[#allocation5 + $0x680] sm:$0xff]
    %v305 = vld [vmem:[#allocation5 + $0x688] sm:$0xff]
    %v306 = vld [vmem:[#allocation5 + $0x690] sm:$0xff]
    %v307 = vld [vmem:[#allocation5 + $0x698] sm:$0xff]
    %v308 = vld [vmem:[#allocation5 + $0x6a0] sm:$0xff]
    %v309 = vld [vmem:[#allocation5 + $0x6a8] sm:$0xff]
    %v310 = vld [vmem:[#allocation5 + $0x6b0] sm:$0xff]
    %v311 = vld [vmem:[#allocation5 + $0x6b8] sm:$0xff]
    %v312 = vld [vmem:[#allocation5 + $0x6c0] sm:$0xff]
    %v313 = vld [vmem:[#allocation5 + $0x6c8] sm:$0xff]
    %v314 = vld [vmem:[#allocation5 + $0x6d0] sm:$0xff]
    %v315 = vld [vmem:[#allocation5 + $0x6d8] sm:$0xff]
    %v316 = vld [vmem:[#allocation5 + $0x6e0] sm:$0xff]
    %v317 = vld [vmem:[#allocation5 + $0x6e8] sm:$0xff]
    %v318 = vld [vmem:[#allocation5 + $0x6f0] sm:$0xff]
    %v319 = vld [vmem:[#allocation5 + $0x6f8] sm:$0xff]
    %v320 = vld [vmem:[#allocation5 + $0x700] sm:$0xff]
    %v321 = vld [vmem:[#allocation5 + $0x708] sm:$0xff]
    %v322 = vld [vmem:[#allocation5 + $0x710] sm:$0xff]
    %v323 = vld [vmem:[#allocation5 + $0x718] sm:$0xff]
    %v324 = vld [vmem:[#allocation5 + $0x720] sm:$0xff]
    %v325 = vld [vmem:[#allocation5 + $0x728] sm:$0xff]
    %v326 = vld [vmem:[#allocation5 + $0x730] sm:$0xff]
    %v327 = vld [vmem:[#allocation5 + $0x738] sm:$0xff]
    %v328 = vld [vmem:[#allocation5 + $0x740] sm:$0xff]
    %v329 = vld [vmem:[#allocation5 + $0x748] sm:$0xff]
    %v330 = vld [vmem:[#allocation5 + $0x750] sm:$0xff]
    %v331 = vld [vmem:[#allocation5 + $0x758] sm:$0xff]
    %v332 = vld [vmem:[#allocation5 + $0x760] sm:$0xff]
    %v333 = vld [vmem:[#allocation5 + $0x768] sm:$0xff]
    %v334 = vld [vmem:[#allocation5 + $0x770] sm:$0xff]
    %v335 = vld [vmem:[#allocation5 + $0x778] sm:$0xff]
    %v336 = vld [vmem:[#allocation5 + $0x780] sm:$0xff]
    %v337 = vld [vmem:[#allocation5 + $0x788] sm:$0xff]
    %v338 = vld [vmem:[#allocation5 + $0x790] sm:$0xff]
    %v339 = vld [vmem:[#allocation5 + $0x798] sm:$0xff]
    %v340 = vld [vmem:[#allocation5 + $0x7a0] sm:$0xff]
    %v341 = vld [vmem:[#allocation5 + $0x7a8] sm:$0xff]
    %v342 = vld [vmem:[#allocation5 + $0x7b0] sm:$0xff]
    %v343 = vld [vmem:[#allocation5 + $0x7b8] sm:$0xff]
    %v344 = vld [vmem:[#allocation5 + $0x7c0] sm:$0xff]
    %v345 = vld [vmem:[#allocation5 + $0x7c8] sm:$0xff]
    %v346 = vld [vmem:[#allocation5 + $0x7d0] sm:$0xff]
    %v347 = vld [vmem:[#allocation5 + $0x7d8] sm:$0xff]
    %v348 = vld [vmem:[#allocation5 + $0x7e0] sm:$0xff]
    %v349 = vld [vmem:[#allocation5 + $0x7e8] sm:$0xff]
    %v350 = vld [vmem:[#allocation5 + $0x7f0] sm:$0xff]
    %v351 = vld [vmem:[#allocation5 + $0x7f8] sm:$0xff]
    %v352 = vld [vmem:[#allocation7] sm:$0xf]
    %v354 = vperm.slane %v352, 0
    %v355 = vperm.slane %v352, 1
    %v356 = vperm.slane %v352, 2
    %v357 = vperm.slane %v352, 3
    %v618 = vunpack.c.l.b16 %v96
    %v619 = vunpack.c.h.b16 %v96
    %v620 = vunpack.c.l.b16 %v97
    %v621 = vunpack.c.h.b16 %v97
    %v622 = vunpack.c.l.b16 %v98
    %v623 = vunpack.c.h.b16 %v98
    %v624 = vunpack.c.l.b16 %v99
    %v625 = vunpack.c.h.b16 %v99
    %v626 = vunpack.c.l.b16 %v100
    %v627 = vunpack.c.h.b16 %v100
    %v628 = vunpack.c.l.b16 %v101
    %v629 = vunpack.c.h.b16 %v101
    %v630 = vunpack.c.l.b16 %v102
    %v631 = vunpack.c.h.b16 %v102
    %v632 = vunpack.c.l.b16 %v103
    %v633 = vunpack.c.h.b16 %v103
    %v634 = vunpack.c.l.b16 %v104
    %v635 = vunpack.c.h.b16 %v104
    %v636 = vunpack.c.l.b16 %v105
    %v637 = vunpack.c.h.b16 %v105
    %v638 = vunpack.c.l.b16 %v106
    %v639 = vunpack.c.h.b16 %v106
    %v640 = vunpack.c.l.b16 %v107
    %v641 = vunpack.c.h.b16 %v107
    %v642 = vunpack.c.l.b16 %v108
    %v643 = vunpack.c.h.b16 %v108
    %v644 = vunpack.c.l.b16 %v109
    %v645 = vunpack.c.h.b16 %v109
    %v646 = vunpack.c.l.b16 %v110
    %v647 = vunpack.c.h.b16 %v110
    %v648 = vunpack.c.l.b16 %v111
    %v649 = vunpack.c.h.b16 %v111
    %v650 = vunpack.c.l.b16 %v112
    %v651 = vunpack.c.h.b16 %v112
    %v652 = vunpack.c.l.b16 %v113
    %v653 = vunpack.c.h.b16 %v113
    %v654 = vunpack.c.l.b16 %v114
    %v655 = vunpack.c.h.b16 %v114
    %v656 = vunpack.c.l.b16 %v115
    %v657 = vunpack.c.h.b16 %v115
    %v658 = vunpack.c.l.b16 %v116
    %v659 = vunpack.c.h.b16 %v116
    %v660 = vunpack.c.l.b16 %v117
    %v661 = vunpack.c.h.b16 %v117
    %v662 = vunpack.c.l.b16 %v118
    %v663 = vunpack.c.h.b16 %v118
    %v664 = vunpack.c.l.b16 %v119
    %v665 = vunpack.c.h.b16 %v119
    %v666 = vunpack.c.l.b16 %v120
    %v667 = vunpack.c.h.b16 %v120
    %v668 = vunpack.c.l.b16 %v121
    %v669 = vunpack.c.h.b16 %v121
    %v670 = vunpack.c.l.b16 %v122
    %v671 = vunpack.c.h.b16 %v122
    %v672 = vunpack.c.l.b16 %v123
    %v673 = vunpack.c.h.b16 %v123
    %v674 = vunpack.c.l.b16 %v124
    %v675 = vunpack.c.h.b16 %v124
    %v676 = vunpack.c.l.b16 %v125
    %v677 = vunpack.c.h.b16 %v125
    %v678 = vunpack.c.l.b16 %v126
    %v679 = vunpack.c.h.b16 %v126
    %v680 = vunpack.c.l.b16 %v127
    %v681 = vunpack.c.h.b16 %v127
    %v682 = vunpack.c.l.b16 %v128
    %v683 = vunpack.c.h.b16 %v128
    %v684 = vunpack.c.l.b16 %v129
    %v685 = vunpack.c.h.b16 %v129
    %v686 = vunpack.c.l.b16 %v130
    %v687 = vunpack.c.h.b16 %v130
    %v688 = vunpack.c.l.b16 %v131
    %v689 = vunpack.c.h.b16 %v131
    %v690 = vunpack.c.l.b16 %v132
    %v691 = vunpack.c.h.b16 %v132
    %v692 = vunpack.c.l.b16 %v133
    %v693 = vunpack.c.h.b16 %v133
    %v694 = vunpack.c.l.b16 %v134
    %v695 = vunpack.c.h.b16 %v134
    %v696 = vunpack.c.l.b16 %v135
    %v697 = vunpack.c.h.b16 %v135
    %v698 = vunpack.c.l.b16 %v136
    %v699 = vunpack.c.h.b16 %v136
    %v700 = vunpack.c.l.b16 %v137
    %v701 = vunpack.c.h.b16 %v137
    %v702 = vunpack.c.l.b16 %v138
    %v703 = vunpack.c.h.b16 %v138
    %v704 = vunpack.c.l.b16 %v139
    %v705 = vunpack.c.h.b16 %v139
    %v706 = vunpack.c.l.b16 %v140
    %v707 = vunpack.c.h.b16 %v140
    %v708 = vunpack.c.l.b16 %v141
    %v709 = vunpack.c.h.b16 %v141
    %v710 = vunpack.c.l.b16 %v142
    %v711 = vunpack.c.h.b16 %v142
    %v712 = vunpack.c.l.b16 %v143
    %v713 = vunpack.c.h.b16 %v143
    %v714 = vunpack.c.l.b16 %v144
    %v715 = vunpack.c.h.b16 %v144
    %v716 = vunpack.c.l.b16 %v145
    %v717 = vunpack.c.h.b16 %v145
    %v718 = vunpack.c.l.b16 %v146
    %v719 = vunpack.c.h.b16 %v146
    %v720 = vunpack.c.l.b16 %v147
    %v721 = vunpack.c.h.b16 %v147
    %v722 = vunpack.c.l.b16 %v148
    %v723 = vunpack.c.h.b16 %v148
    %v724 = vunpack.c.l.b16 %v149
    %v725 = vunpack.c.h.b16 %v149
    %v726 = vunpack.c.l.b16 %v150
    %v727 = vunpack.c.h.b16 %v150
    %v728 = vunpack.c.l.b16 %v151
    %v729 = vunpack.c.h.b16 %v151
    %v730 = vunpack.c.l.b16 %v152
    %v731 = vunpack.c.h.b16 %v152
    %v732 = vunpack.c.l.b16 %v153
    %v733 = vunpack.c.h.b16 %v153
    %v734 = vunpack.c.l.b16 %v154
    %v735 = vunpack.c.h.b16 %v154
    %v736 = vunpack.c.l.b16 %v155
    %v737 = vunpack.c.h.b16 %v155
    %v738 = vunpack.c.l.b16 %v156
    %v739 = vunpack.c.h.b16 %v156
    %v740 = vunpack.c.l.b16 %v157
    %v741 = vunpack.c.h.b16 %v157
    %v742 = vunpack.c.l.b16 %v158
    %v743 = vunpack.c.h.b16 %v158
    %v744 = vunpack.c.l.b16 %v159
    %v745 = vunpack.c.h.b16 %v159
    %v746 = vunpack.c.l.b16 %v160
    %v747 = vunpack.c.h.b16 %v160
    %v748 = vunpack.c.l.b16 %v161
    %v749 = vunpack.c.h.b16 %v161
    %v750 = vunpack.c.l.b16 %v162
    %v751 = vunpack.c.h.b16 %v162
    %v752 = vunpack.c.l.b16 %v163
    %v753 = vunpack.c.h.b16 %v163
    %v754 = vunpack.c.l.b16 %v164
    %v755 = vunpack.c.h.b16 %v164
    %v756 = vunpack.c.l.b16 %v165
    %v757 = vunpack.c.h.b16 %v165
    %v758 = vunpack.c.l.b16 %v166
    %v759 = vunpack.c.h.b16 %v166
    %v760 = vunpack.c.l.b16 %v167
    %v761 = vunpack.c.h.b16 %v167
    %v762 = vunpack.c.l.b16 %v168
    %v763 = vunpack.c.h.b16 %v168
    %v764 = vunpack.c.l.b16 %v169
    %v765 = vunpack.c.h.b16 %v169
    %v766 = vunpack.c.l.b16 %v170
    %v767 = vunpack.c.h.b16 %v170
    %v768 = vunpack.c.l.b16 %v171
    %v769 = vunpack.c.h.b16 %v171
    %v770 = vunpack.c.l.b16 %v172
    %v771 = vunpack.c.h.b16 %v172
    %v772 = vunpack.c.l.b16 %v173
    %v773 = vunpack.c.h.b16 %v173
    %v774 = vunpack.c.l.b16 %v174
    %v775 = vunpack.c.h.b16 %v174
    %v776 = vunpack.c.l.b16 %v175
    %v777 = vunpack.c.h.b16 %v175
    %v778 = vunpack.c.l.b16 %v176
    %v779 = vunpack.c.h.b16 %v176
    %v780 = vunpack.c.l.b16 %v177
    %v781 = vunpack.c.h.b16 %v177
    %v782 = vunpack.c.l.b16 %v178
    %v783 = vunpack.c.h.b16 %v178
    %v784 = vunpack.c.l.b16 %v179
    %v785 = vunpack.c.h.b16 %v179
    %v786 = vunpack.c.l.b16 %v180
    %v787 = vunpack.c.h.b16 %v180
    %v788 = vunpack.c.l.b16 %v181
    %v789 = vunpack.c.h.b16 %v181
    %v790 = vunpack.c.l.b16 %v182
    %v791 = vunpack.c.h.b16 %v182
    %v792 = vunpack.c.l.b16 %v183
    %v793 = vunpack.c.h.b16 %v183
    %v794 = vunpack.c.l.b16 %v184
    %v795 = vunpack.c.h.b16 %v184
    %v796 = vunpack.c.l.b16 %v185
    %v797 = vunpack.c.h.b16 %v185
    %v798 = vunpack.c.l.b16 %v186
    %v799 = vunpack.c.h.b16 %v186
    %v800 = vunpack.c.l.b16 %v187
    %v801 = vunpack.c.h.b16 %v187
    %v802 = vunpack.c.l.b16 %v188
    %v803 = vunpack.c.h.b16 %v188
    %v804 = vunpack.c.l.b16 %v189
    %v805 = vunpack.c.h.b16 %v189
    %v806 = vunpack.c.l.b16 %v190
    %v807 = vunpack.c.h.b16 %v190
    %v808 = vunpack.c.l.b16 %v191
    %v809 = vunpack.c.h.b16 %v191
    %v810 = vunpack.c.l.b16 %v192
    %v811 = vunpack.c.h.b16 %v192
    %v812 = vunpack.c.l.b16 %v193
    %v813 = vunpack.c.h.b16 %v193
    %v814 = vunpack.c.l.b16 %v194
    %v815 = vunpack.c.h.b16 %v194
    %v816 = vunpack.c.l.b16 %v195
    %v817 = vunpack.c.h.b16 %v195
    %v818 = vunpack.c.l.b16 %v196
    %v819 = vunpack.c.h.b16 %v196
    %v820 = vunpack.c.l.b16 %v197
    %v821 = vunpack.c.h.b16 %v197
    %v822 = vunpack.c.l.b16 %v198
    %v823 = vunpack.c.h.b16 %v198
    %v824 = vunpack.c.l.b16 %v199
    %v825 = vunpack.c.h.b16 %v199
    %v826 = vunpack.c.l.b16 %v200
    %v827 = vunpack.c.h.b16 %v200
    %v828 = vunpack.c.l.b16 %v201
    %v829 = vunpack.c.h.b16 %v201
    %v830 = vunpack.c.l.b16 %v202
    %v831 = vunpack.c.h.b16 %v202
    %v832 = vunpack.c.l.b16 %v203
    %v833 = vunpack.c.h.b16 %v203
    %v834 = vunpack.c.l.b16 %v204
    %v835 = vunpack.c.h.b16 %v204
    %v836 = vunpack.c.l.b16 %v205
    %v837 = vunpack.c.h.b16 %v205
    %v838 = vunpack.c.l.b16 %v206
    %v839 = vunpack.c.h.b16 %v206
    %v840 = vunpack.c.l.b16 %v207
    %v841 = vunpack.c.h.b16 %v207
    %v842 = vunpack.c.l.b16 %v208
    %v843 = vunpack.c.h.b16 %v208
    %v844 = vunpack.c.l.b16 %v209
    %v845 = vunpack.c.h.b16 %v209
    %v846 = vunpack.c.l.b16 %v210
    %v847 = vunpack.c.h.b16 %v210
    %v848 = vunpack.c.l.b16 %v211
    %v849 = vunpack.c.h.b16 %v211
    %v850 = vunpack.c.l.b16 %v212
    %v851 = vunpack.c.h.b16 %v212
    %v852 = vunpack.c.l.b16 %v213
    %v853 = vunpack.c.h.b16 %v213
    %v854 = vunpack.c.l.b16 %v214
    %v855 = vunpack.c.h.b16 %v214
    %v856 = vunpack.c.l.b16 %v215
    %v857 = vunpack.c.h.b16 %v215
    %v858 = vunpack.c.l.b16 %v216
    %v859 = vunpack.c.h.b16 %v216
    %v860 = vunpack.c.l.b16 %v217
    %v861 = vunpack.c.h.b16 %v217
    %v862 = vunpack.c.l.b16 %v218
    %v863 = vunpack.c.h.b16 %v218
    %v864 = vunpack.c.l.b16 %v219
    %v865 = vunpack.c.h.b16 %v219
    %v866 = vunpack.c.l.b16 %v220
    %v867 = vunpack.c.h.b16 %v220
    %v868 = vunpack.c.l.b16 %v221
    %v869 = vunpack.c.h.b16 %v221
    %v870 = vunpack.c.l.b16 %v222
    %v871 = vunpack.c.h.b16 %v222
    %v872 = vunpack.c.l.b16 %v223
    %v873 = vunpack.c.h.b16 %v223
    %v874 = vunpack.c.l.b16 %v224
    %v875 = vunpack.c.h.b16 %v224
    %v876 = vunpack.c.l.b16 %v225
    %v877 = vunpack.c.h.b16 %v225
    %v878 = vunpack.c.l.b16 %v226
    %v879 = vunpack.c.h.b16 %v226
    %v880 = vunpack.c.l.b16 %v227
    %v881 = vunpack.c.h.b16 %v227
    %v882 = vunpack.c.l.b16 %v228
    %v883 = vunpack.c.h.b16 %v228
    %v884 = vunpack.c.l.b16 %v229
    %v885 = vunpack.c.h.b16 %v229
    %v886 = vunpack.c.l.b16 %v230
    %v887 = vunpack.c.h.b16 %v230
    %v888 = vunpack.c.l.b16 %v231
    %v889 = vunpack.c.h.b16 %v231
    %v890 = vunpack.c.l.b16 %v232
    %v891 = vunpack.c.h.b16 %v232
    %v892 = vunpack.c.l.b16 %v233
    %v893 = vunpack.c.h.b16 %v233
    %v894 = vunpack.c.l.b16 %v234
    %v895 = vunpack.c.h.b16 %v234
    %v896 = vunpack.c.l.b16 %v235
    %v897 = vunpack.c.h.b16 %v235
    %v898 = vunpack.c.l.b16 %v236
    %v899 = vunpack.c.h.b16 %v236
    %v900 = vunpack.c.l.b16 %v237
    %v901 = vunpack.c.h.b16 %v237
    %v902 = vunpack.c.l.b16 %v238
    %v903 = vunpack.c.h.b16 %v238
    %v904 = vunpack.c.l.b16 %v239
    %v905 = vunpack.c.h.b16 %v239
    %v906 = vunpack.c.l.b16 %v240
    %v907 = vunpack.c.h.b16 %v240
    %v908 = vunpack.c.l.b16 %v241
    %v909 = vunpack.c.h.b16 %v241
    %v910 = vunpack.c.l.b16 %v242
    %v911 = vunpack.c.h.b16 %v242
    %v912 = vunpack.c.l.b16 %v243
    %v913 = vunpack.c.h.b16 %v243
    %v914 = vunpack.c.l.b16 %v244
    %v915 = vunpack.c.h.b16 %v244
    %v916 = vunpack.c.l.b16 %v245
    %v917 = vunpack.c.h.b16 %v245
    %v918 = vunpack.c.l.b16 %v246
    %v919 = vunpack.c.h.b16 %v246
    %v920 = vunpack.c.l.b16 %v247
    %v921 = vunpack.c.h.b16 %v247
    %v922 = vunpack.c.l.b16 %v248
    %v923 = vunpack.c.h.b16 %v248
    %v924 = vunpack.c.l.b16 %v249
    %v925 = vunpack.c.h.b16 %v249
    %v926 = vunpack.c.l.b16 %v250
    %v927 = vunpack.c.h.b16 %v250
    %v928 = vunpack.c.l.b16 %v251
    %v929 = vunpack.c.h.b16 %v251
    %v930 = vunpack.c.l.b16 %v252
    %v931 = vunpack.c.h.b16 %v252
    %v932 = vunpack.c.l.b16 %v253
    %v933 = vunpack.c.h.b16 %v253
    %v934 = vunpack.c.l.b16 %v254
    %v935 = vunpack.c.h.b16 %v254
    %v936 = vunpack.c.l.b16 %v255
    %v937 = vunpack.c.h.b16 %v255
    %v938 = vunpack.c.l.b16 %v256
    %v939 = vunpack.c.h.b16 %v256
    %v940 = vunpack.c.l.b16 %v257
    %v941 = vunpack.c.h.b16 %v257
    %v942 = vunpack.c.l.b16 %v258
    %v943 = vunpack.c.h.b16 %v258
    %v944 = vunpack.c.l.b16 %v259
    %v945 = vunpack.c.h.b16 %v259
    %v946 = vunpack.c.l.b16 %v260
    %v947 = vunpack.c.h.b16 %v260
    %v948 = vunpack.c.l.b16 %v261
    %v949 = vunpack.c.h.b16 %v261
    %v950 = vunpack.c.l.b16 %v262
    %v951 = vunpack.c.h.b16 %v262
    %v952 = vunpack.c.l.b16 %v263
    %v953 = vunpack.c.h.b16 %v263
    %v954 = vunpack.c.l.b16 %v264
    %v955 = vunpack.c.h.b16 %v264
    %v956 = vunpack.c.l.b16 %v265
    %v957 = vunpack.c.h.b16 %v265
    %v958 = vunpack.c.l.b16 %v266
    %v959 = vunpack.c.h.b16 %v266
    %v960 = vunpack.c.l.b16 %v267
    %v961 = vunpack.c.h.b16 %v267
    %v962 = vunpack.c.l.b16 %v268
    %v963 = vunpack.c.h.b16 %v268
    %v964 = vunpack.c.l.b16 %v269
    %v965 = vunpack.c.h.b16 %v269
    %v966 = vunpack.c.l.b16 %v270
    %v967 = vunpack.c.h.b16 %v270
    %v968 = vunpack.c.l.b16 %v271
    %v969 = vunpack.c.h.b16 %v271
    %v970 = vunpack.c.l.b16 %v272
    %v971 = vunpack.c.h.b16 %v272
    %v972 = vunpack.c.l.b16 %v273
    %v973 = vunpack.c.h.b16 %v273
    %v974 = vunpack.c.l.b16 %v274
    %v975 = vunpack.c.h.b16 %v274
    %v976 = vunpack.c.l.b16 %v275
    %v977 = vunpack.c.h.b16 %v275
    %v978 = vunpack.c.l.b16 %v276
    %v979 = vunpack.c.h.b16 %v276
    %v980 = vunpack.c.l.b16 %v277
    %v981 = vunpack.c.h.b16 %v277
    %v982 = vunpack.c.l.b16 %v278
    %v983 = vunpack.c.h.b16 %v278
    %v984 = vunpack.c.l.b16 %v279
    %v985 = vunpack.c.h.b16 %v279
    %v986 = vunpack.c.l.b16 %v280
    %v987 = vunpack.c.h.b16 %v280
    %v988 = vunpack.c.l.b16 %v281
    %v989 = vunpack.c.h.b16 %v281
    %v990 = vunpack.c.l.b16 %v282
    %v991 = vunpack.c.h.b16 %v282
    %v992 = vunpack.c.l.b16 %v283
    %v993 = vunpack.c.h.b16 %v283
    %v994 = vunpack.c.l.b16 %v284
    %v995 = vunpack.c.h.b16 %v284
    %v996 = vunpack.c.l.b16 %v285
    %v997 = vunpack.c.h.b16 %v285
    %v998 = vunpack.c.l.b16 %v286
    %v999 = vunpack.c.h.b16 %v286
    %v1000 = vunpack.c.l.b16 %v287
    %v1001 = vunpack.c.h.b16 %v287
    %v1002 = vunpack.c.l.b16 %v288
    %v1003 = vunpack.c.h.b16 %v288
    %v1004 = vunpack.c.l.b16 %v289
    %v1005 = vunpack.c.h.b16 %v289
    %v1006 = vunpack.c.l.b16 %v290
    %v1007 = vunpack.c.h.b16 %v290
    %v1008 = vunpack.c.l.b16 %v291
    %v1009 = vunpack.c.h.b16 %v291
    %v1010 = vunpack.c.l.b16 %v292
    %v1011 = vunpack.c.h.b16 %v292
    %v1012 = vunpack.c.l.b16 %v293
    %v1013 = vunpack.c.h.b16 %v293
    %v1014 = vunpack.c.l.b16 %v294
    %v1015 = vunpack.c.h.b16 %v294
    %v1016 = vunpack.c.l.b16 %v295
    %v1017 = vunpack.c.h.b16 %v295
    %v1018 = vunpack.c.l.b16 %v296
    %v1019 = vunpack.c.h.b16 %v296
    %v1020 = vunpack.c.l.b16 %v297
    %v1021 = vunpack.c.h.b16 %v297
    %v1022 = vunpack.c.l.b16 %v298
    %v1023 = vunpack.c.h.b16 %v298
    %v1024 = vunpack.c.l.b16 %v299
    %v1025 = vunpack.c.h.b16 %v299
    %v1026 = vunpack.c.l.b16 %v300
    %v1027 = vunpack.c.h.b16 %v300
    %v1028 = vunpack.c.l.b16 %v301
    %v1029 = vunpack.c.h.b16 %v301
    %v1030 = vunpack.c.l.b16 %v302
    %v1031 = vunpack.c.h.b16 %v302
    %v1032 = vunpack.c.l.b16 %v303
    %v1033 = vunpack.c.h.b16 %v303
    %v1034 = vunpack.c.l.b16 %v304
    %v1035 = vunpack.c.h.b16 %v304
    %v1036 = vunpack.c.l.b16 %v305
    %v1037 = vunpack.c.h.b16 %v305
    %v1038 = vunpack.c.l.b16 %v306
    %v1039 = vunpack.c.h.b16 %v306
    %v1040 = vunpack.c.l.b16 %v307
    %v1041 = vunpack.c.h.b16 %v307
    %v1042 = vunpack.c.l.b16 %v308
    %v1043 = vunpack.c.h.b16 %v308
    %v1044 = vunpack.c.l.b16 %v309
    %v1045 = vunpack.c.h.b16 %v309
    %v1046 = vunpack.c.l.b16 %v310
    %v1047 = vunpack.c.h.b16 %v310
    %v1048 = vunpack.c.l.b16 %v311
    %v1049 = vunpack.c.h.b16 %v311
    %v1050 = vunpack.c.l.b16 %v312
    %v1051 = vunpack.c.h.b16 %v312
    %v1052 = vunpack.c.l.b16 %v313
    %v1053 = vunpack.c.h.b16 %v313
    %v1054 = vunpack.c.l.b16 %v314
    %v1055 = vunpack.c.h.b16 %v314
    %v1056 = vunpack.c.l.b16 %v315
    %v1057 = vunpack.c.h.b16 %v315
    %v1058 = vunpack.c.l.b16 %v316
    %v1059 = vunpack.c.h.b16 %v316
    %v1060 = vunpack.c.l.b16 %v317
    %v1061 = vunpack.c.h.b16 %v317
    %v1062 = vunpack.c.l.b16 %v318
    %v1063 = vunpack.c.h.b16 %v318
    %v1064 = vunpack.c.l.b16 %v319
    %v1065 = vunpack.c.h.b16 %v319
    %v1066 = vunpack.c.l.b16 %v320
    %v1067 = vunpack.c.h.b16 %v320
    %v1068 = vunpack.c.l.b16 %v321
    %v1069 = vunpack.c.h.b16 %v321
    %v1070 = vunpack.c.l.b16 %v322
    %v1071 = vunpack.c.h.b16 %v322
    %v1072 = vunpack.c.l.b16 %v323
    %v1073 = vunpack.c.h.b16 %v323
    %v1074 = vunpack.c.l.b16 %v324
    %v1075 = vunpack.c.h.b16 %v324
    %v1076 = vunpack.c.l.b16 %v325
    %v1077 = vunpack.c.h.b16 %v325
    %v1078 = vunpack.c.l.b16 %v326
    %v1079 = vunpack.c.h.b16 %v326
    %v1080 = vunpack.c.l.b16 %v327
    %v1081 = vunpack.c.h.b16 %v327
    %v1082 = vunpack.c.l.b16 %v328
    %v1083 = vunpack.c.h.b16 %v328
    %v1084 = vunpack.c.l.b16 %v329
    %v1085 = vunpack.c.h.b16 %v329
    %v1086 = vunpack.c.l.b16 %v330
    %v1087 = vunpack.c.h.b16 %v330
    %v1088 = vunpack.c.l.b16 %v331
    %v1089 = vunpack.c.h.b16 %v331
    %v1090 = vunpack.c.l.b16 %v332
    %v1091 = vunpack.c.h.b16 %v332
    %v1092 = vunpack.c.l.b16 %v333
    %v1093 = vunpack.c.h.b16 %v333
    %v1094 = vunpack.c.l.b16 %v334
    %v1095 = vunpack.c.h.b16 %v334
    %v1096 = vunpack.c.l.b16 %v335
    %v1097 = vunpack.c.h.b16 %v335
    %v1098 = vunpack.c.l.b16 %v336
    %v1099 = vunpack.c.h.b16 %v336
    %v1100 = vunpack.c.l.b16 %v337
    %v1101 = vunpack.c.h.b16 %v337
    %v1102 = vunpack.c.l.b16 %v338
    %v1103 = vunpack.c.h.b16 %v338
    %v1104 = vunpack.c.l.b16 %v339
    %v1105 = vunpack.c.h.b16 %v339
    %v1106 = vunpack.c.l.b16 %v340
    %v1107 = vunpack.c.h.b16 %v340
    %v1108 = vunpack.c.l.b16 %v341
    %v1109 = vunpack.c.h.b16 %v341
    %v1110 = vunpack.c.l.b16 %v342
    %v1111 = vunpack.c.h.b16 %v342
    %v1112 = vunpack.c.l.b16 %v343
    %v1113 = vunpack.c.h.b16 %v343
    %v1114 = vunpack.c.l.b16 %v344
    %v1115 = vunpack.c.h.b16 %v344
    %v1116 = vunpack.c.l.b16 %v345
    %v1117 = vunpack.c.h.b16 %v345
    %v1118 = vunpack.c.l.b16 %v346
    %v1119 = vunpack.c.h.b16 %v346
    %v1120 = vunpack.c.l.b16 %v347
    %v1121 = vunpack.c.h.b16 %v347
    %v1122 = vunpack.c.l.b16 %v348
    %v1123 = vunpack.c.h.b16 %v348
    %v1124 = vunpack.c.l.b16 %v349
    %v1125 = vunpack.c.h.b16 %v349
    %v1126 = vunpack.c.l.b16 %v350
    %v1127 = vunpack.c.h.b16 %v350
    %v1128 = vunpack.c.l.b16 %v351
    %v1129 = vunpack.c.h.b16 %v351
    %v1130 = vpack.c.b16 %v622, %v618
    %v1131 = vpack.c.b16 %v623, %v619
    %v1132 = vpack.c.b16 %v624, %v620
    %v1133 = vpack.c.b16 %v625, %v621
    %v1134 = vpack.c.b16 %v630, %v626
    %v1135 = vpack.c.b16 %v631, %v627
    %v1136 = vpack.c.b16 %v632, %v628
    %v1137 = vpack.c.b16 %v633, %v629
    %v1138 = vpack.c.b16 %v638, %v634
    %v1139 = vpack.c.b16 %v639, %v635
    %v1140 = vpack.c.b16 %v640, %v636
    %v1141 = vpack.c.b16 %v641, %v637
    %v1142 = vpack.c.b16 %v646, %v642
    %v1143 = vpack.c.b16 %v647, %v643
    %v1144 = vpack.c.b16 %v648, %v644
    %v1145 = vpack.c.b16 %v649, %v645
    %v1146 = vpack.c.b16 %v654, %v650
    %v1147 = vpack.c.b16 %v655, %v651
    %v1148 = vpack.c.b16 %v656, %v652
    %v1149 = vpack.c.b16 %v657, %v653
    %v1150 = vpack.c.b16 %v662, %v658
    %v1151 = vpack.c.b16 %v663, %v659
    %v1152 = vpack.c.b16 %v664, %v660
    %v1153 = vpack.c.b16 %v665, %v661
    %v1154 = vpack.c.b16 %v670, %v666
    %v1155 = vpack.c.b16 %v671, %v667
    %v1156 = vpack.c.b16 %v672, %v668
    %v1157 = vpack.c.b16 %v673, %v669
    %v1158 = vpack.c.b16 %v678, %v674
    %v1159 = vpack.c.b16 %v679, %v675
    %v1160 = vpack.c.b16 %v680, %v676
    %v1161 = vpack.c.b16 %v681, %v677
    %v1162 = vpack.c.b16 %v686, %v682
    %v1163 = vpack.c.b16 %v687, %v683
    %v1164 = vpack.c.b16 %v688, %v684
    %v1165 = vpack.c.b16 %v689, %v685
    %v1166 = vpack.c.b16 %v694, %v690
    %v1167 = vpack.c.b16 %v695, %v691
    %v1168 = vpack.c.b16 %v696, %v692
    %v1169 = vpack.c.b16 %v697, %v693
    %v1170 = vpack.c.b16 %v702, %v698
    %v1171 = vpack.c.b16 %v703, %v699
    %v1172 = vpack.c.b16 %v704, %v700
    %v1173 = vpack.c.b16 %v705, %v701
    %v1174 = vpack.c.b16 %v710, %v706
    %v1175 = vpack.c.b16 %v711, %v707
    %v1176 = vpack.c.b16 %v712, %v708
    %v1177 = vpack.c.b16 %v713, %v709
    %v1178 = vpack.c.b16 %v718, %v714
    %v1179 = vpack.c.b16 %v719, %v715
    %v1180 = vpack.c.b16 %v720, %v716
    %v1181 = vpack.c.b16 %v721, %v717
    %v1182 = vpack.c.b16 %v726, %v722
    %v1183 = vpack.c.b16 %v727, %v723
    %v1184 = vpack.c.b16 %v728, %v724
    %v1185 = vpack.c.b16 %v729, %v725
    %v1186 = vpack.c.b16 %v734, %v730
    %v1187 = vpack.c.b16 %v735, %v731
    %v1188 = vpack.c.b16 %v736, %v732
    %v1189 = vpack.c.b16 %v737, %v733
    %v1190 = vpack.c.b16 %v742, %v738
    %v1191 = vpack.c.b16 %v743, %v739
    %v1192 = vpack.c.b16 %v744, %v740
    %v1193 = vpack.c.b16 %v745, %v741
    %v1194 = vpack.c.b16 %v750, %v746
    %v1195 = vpack.c.b16 %v751, %v747
    %v1196 = vpack.c.b16 %v752, %v748
    %v1197 = vpack.c.b16 %v753, %v749
    %v1198 = vpack.c.b16 %v758, %v754
    %v1199 = vpack.c.b16 %v759, %v755
    %v1200 = vpack.c.b16 %v760, %v756
    %v1201 = vpack.c.b16 %v761, %v757
    %v1202 = vpack.c.b16 %v766, %v762
    %v1203 = vpack.c.b16 %v767, %v763
    %v1204 = vpack.c.b16 %v768, %v764
    %v1205 = vpack.c.b16 %v769, %v765
    %v1206 = vpack.c.b16 %v774, %v770
    %v1207 = vpack.c.b16 %v775, %v771
    %v1208 = vpack.c.b16 %v776, %v772
    %v1209 = vpack.c.b16 %v777, %v773
    %v1210 = vpack.c.b16 %v782, %v778
    %v1211 = vpack.c.b16 %v783, %v779
    %v1212 = vpack.c.b16 %v784, %v780
    %v1213 = vpack.c.b16 %v785, %v781
    %v1214 = vpack.c.b16 %v790, %v786
    %v1215 = vpack.c.b16 %v791, %v787
    %v1216 = vpack.c.b16 %v792, %v788
    %v1217 = vpack.c.b16 %v793, %v789
    %v1218 = vpack.c.b16 %v798, %v794
    %v1219 = vpack.c.b16 %v799, %v795
    %v1220 = vpack.c.b16 %v800, %v796
    %v1221 = vpack.c.b16 %v801, %v797
    %v1222 = vpack.c.b16 %v806, %v802
    %v1223 = vpack.c.b16 %v807, %v803
    %v1224 = vpack.c.b16 %v808, %v804
    %v1225 = vpack.c.b16 %v809, %v805
    %v1226 = vpack.c.b16 %v814, %v810
    %v1227 = vpack.c.b16 %v815, %v811
    %v1228 = vpack.c.b16 %v816, %v812
    %v1229 = vpack.c.b16 %v817, %v813
    %v1230 = vpack.c.b16 %v822, %v818
    %v1231 = vpack.c.b16 %v823, %v819
    %v1232 = vpack.c.b16 %v824, %v820
    %v1233 = vpack.c.b16 %v825, %v821
    %v1234 = vpack.c.b16 %v830, %v826
    %v1235 = vpack.c.b16 %v831, %v827
    %v1236 = vpack.c.b16 %v832, %v828
    %v1237 = vpack.c.b16 %v833, %v829
    %v1238 = vpack.c.b16 %v838, %v834
    %v1239 = vpack.c.b16 %v839, %v835
    %v1240 = vpack.c.b16 %v840, %v836
    %v1241 = vpack.c.b16 %v841, %v837
    %v1242 = vpack.c.b16 %v846, %v842
    %v1243 = vpack.c.b16 %v847, %v843
    %v1244 = vpack.c.b16 %v848, %v844
    %v1245 = vpack.c.b16 %v849, %v845
    %v1246 = vpack.c.b16 %v854, %v850
    %v1247 = vpack.c.b16 %v855, %v851
    %v1248 = vpack.c.b16 %v856, %v852
    %v1249 = vpack.c.b16 %v857, %v853
    %v1250 = vpack.c.b16 %v862, %v858
    %v1251 = vpack.c.b16 %v863, %v859
    %v1252 = vpack.c.b16 %v864, %v860
    %v1253 = vpack.c.b16 %v865, %v861
    %v1254 = vpack.c.b16 %v870, %v866
    %v1255 = vpack.c.b16 %v871, %v867
    %v1256 = vpack.c.b16 %v872, %v868
    %v1257 = vpack.c.b16 %v873, %v869
    %v1258 = vpack.c.b16 %v878, %v874
    %v1259 = vpack.c.b16 %v879, %v875
    %v1260 = vpack.c.b16 %v880, %v876
    %v1261 = vpack.c.b16 %v881, %v877
    %v1262 = vpack.c.b16 %v886, %v882
    %v1263 = vpack.c.b16 %v887, %v883
    %v1264 = vpack.c.b16 %v888, %v884
    %v1265 = vpack.c.b16 %v889, %v885
    %v1266 = vpack.c.b16 %v894, %v890
    %v1267 = vpack.c.b16 %v895, %v891
    %v1268 = vpack.c.b16 %v896, %v892
    %v1269 = vpack.c.b16 %v897, %v893
    %v1270 = vpack.c.b16 %v902, %v898
    %v1271 = vpack.c.b16 %v903, %v899
    %v1272 = vpack.c.b16 %v904, %v900
    %v1273 = vpack.c.b16 %v905, %v901
    %v1274 = vpack.c.b16 %v910, %v906
    %v1275 = vpack.c.b16 %v911, %v907
    %v1276 = vpack.c.b16 %v912, %v908
    %v1277 = vpack.c.b16 %v913, %v909
    %v1278 = vpack.c.b16 %v918, %v914
    %v1279 = vpack.c.b16 %v919, %v915
    %v1280 = vpack.c.b16 %v920, %v916
    %v1281 = vpack.c.b16 %v921, %v917
    %v1282 = vpack.c.b16 %v926, %v922
    %v1283 = vpack.c.b16 %v927, %v923
    %v1284 = vpack.c.b16 %v928, %v924
    %v1285 = vpack.c.b16 %v929, %v925
    %v1286 = vpack.c.b16 %v934, %v930
    %v1287 = vpack.c.b16 %v935, %v931
    %v1288 = vpack.c.b16 %v936, %v932
    %v1289 = vpack.c.b16 %v937, %v933
    %v1290 = vpack.c.b16 %v942, %v938
    %v1291 = vpack.c.b16 %v943, %v939
    %v1292 = vpack.c.b16 %v944, %v940
    %v1293 = vpack.c.b16 %v945, %v941
    %v1294 = vpack.c.b16 %v950, %v946
    %v1295 = vpack.c.b16 %v951, %v947
    %v1296 = vpack.c.b16 %v952, %v948
    %v1297 = vpack.c.b16 %v953, %v949
    %v1298 = vpack.c.b16 %v958, %v954
    %v1299 = vpack.c.b16 %v959, %v955
    %v1300 = vpack.c.b16 %v960, %v956
    %v1301 = vpack.c.b16 %v961, %v957
    %v1302 = vpack.c.b16 %v966, %v962
    %v1303 = vpack.c.b16 %v967, %v963
    %v1304 = vpack.c.b16 %v968, %v964
    %v1305 = vpack.c.b16 %v969, %v965
    %v1306 = vpack.c.b16 %v974, %v970
    %v1307 = vpack.c.b16 %v975, %v971
    %v1308 = vpack.c.b16 %v976, %v972
    %v1309 = vpack.c.b16 %v977, %v973
    %v1310 = vpack.c.b16 %v982, %v978
    %v1311 = vpack.c.b16 %v983, %v979
    %v1312 = vpack.c.b16 %v984, %v980
    %v1313 = vpack.c.b16 %v985, %v981
    %v1314 = vpack.c.b16 %v990, %v986
    %v1315 = vpack.c.b16 %v991, %v987
    %v1316 = vpack.c.b16 %v992, %v988
    %v1317 = vpack.c.b16 %v993, %v989
    %v1318 = vpack.c.b16 %v998, %v994
    %v1319 = vpack.c.b16 %v999, %v995
    %v1320 = vpack.c.b16 %v1000, %v996
    %v1321 = vpack.c.b16 %v1001, %v997
    %v1322 = vpack.c.b16 %v1006, %v1002
    %v1323 = vpack.c.b16 %v1007, %v1003
    %v1324 = vpack.c.b16 %v1008, %v1004
    %v1325 = vpack.c.b16 %v1009, %v1005
    %v1326 = vpack.c.b16 %v1014, %v1010
    %v1327 = vpack.c.b16 %v1015, %v1011
    %v1328 = vpack.c.b16 %v1016, %v1012
    %v1329 = vpack.c.b16 %v1017, %v1013
    %v1330 = vpack.c.b16 %v1022, %v1018
    %v1331 = vpack.c.b16 %v1023, %v1019
    %v1332 = vpack.c.b16 %v1024, %v1020
    %v1333 = vpack.c.b16 %v1025, %v1021
    %v1334 = vpack.c.b16 %v1030, %v1026
    %v1335 = vpack.c.b16 %v1031, %v1027
    %v1336 = vpack.c.b16 %v1032, %v1028
    %v1337 = vpack.c.b16 %v1033, %v1029
    %v1338 = vpack.c.b16 %v1038, %v1034
    %v1339 = vpack.c.b16 %v1039, %v1035
    %v1340 = vpack.c.b16 %v1040, %v1036
    %v1341 = vpack.c.b16 %v1041, %v1037
    %v1342 = vpack.c.b16 %v1046, %v1042
    %v1343 = vpack.c.b16 %v1047, %v1043
    %v1344 = vpack.c.b16 %v1048, %v1044
    %v1345 = vpack.c.b16 %v1049, %v1045
    %v1346 = vpack.c.b16 %v1054, %v1050
    %v1347 = vpack.c.b16 %v1055, %v1051
    %v1348 = vpack.c.b16 %v1056, %v1052
    %v1349 = vpack.c.b16 %v1057, %v1053
    %v1350 = vpack.c.b16 %v1062, %v1058
    %v1351 = vpack.c.b16 %v1063, %v1059
    %v1352 = vpack.c.b16 %v1064, %v1060
    %v1353 = vpack.c.b16 %v1065, %v1061
    %v1354 = vpack.c.b16 %v1070, %v1066
    %v1355 = vpack.c.b16 %v1071, %v1067
    %v1356 = vpack.c.b16 %v1072, %v1068
    %v1357 = vpack.c.b16 %v1073, %v1069
    %v1358 = vpack.c.b16 %v1078, %v1074
    %v1359 = vpack.c.b16 %v1079, %v1075
    %v1360 = vpack.c.b16 %v1080, %v1076
    %v1361 = vpack.c.b16 %v1081, %v1077
    %v1362 = vpack.c.b16 %v1086, %v1082
    %v1363 = vpack.c.b16 %v1087, %v1083
    %v1364 = vpack.c.b16 %v1088, %v1084
    %v1365 = vpack.c.b16 %v1089, %v1085
    %v1366 = vpack.c.b16 %v1094, %v1090
    %v1367 = vpack.c.b16 %v1095, %v1091
    %v1368 = vpack.c.b16 %v1096, %v1092
    %v1369 = vpack.c.b16 %v1097, %v1093
    %v1370 = vpack.c.b16 %v1102, %v1098
    %v1371 = vpack.c.b16 %v1103, %v1099
    %v1372 = vpack.c.b16 %v1104, %v1100
    %v1373 = vpack.c.b16 %v1105, %v1101
    %v1374 = vpack.c.b16 %v1110, %v1106
    %v1375 = vpack.c.b16 %v1111, %v1107
    %v1376 = vpack.c.b16 %v1112, %v1108
    %v1377 = vpack.c.b16 %v1113, %v1109
    %v1378 = vpack.c.b16 %v1118, %v1114
    %v1379 = vpack.c.b16 %v1119, %v1115
    %v1380 = vpack.c.b16 %v1120, %v1116
    %v1381 = vpack.c.b16 %v1121, %v1117
    %v1382 = vpack.c.b16 %v1126, %v1122
    %v1383 = vpack.c.b16 %v1127, %v1123
    %v1384 = vpack.c.b16 %v1128, %v1124
    %v1385 = vpack.c.b16 %v1129, %v1125
    %1642 = vmatpush.bf16.msra.mxu0 %v1158
    %1643 = vmatpush.bf16.msra.mxu0 %v1154
    %1644 = vmatpush.bf16.msra.mxu0 %v1150
    %1645 = vmatpush.bf16.msra.mxu0 %v1146
    %1646 = vmatpush.bf16.msra.mxu0 %v1142
    %1647 = vmatpush.bf16.msra.mxu0 %v1138
    %1648 = vmatpush.bf16.msra.mxu0 %v1134
    %1649 = vmatpush.bf16.msra.mxu0 %v1130
    %1650 = vmatmul.bf16.gmra.mxu0 %v88
    %v1651 = vpop.f32.mrf.mxu0
    %v1652 = vadd.f32 %v354, %v1651
    %v1653 = vpop.f32.mrf.mxu0
    %1654 = vdwg.mxu0
    %1655 = vmatpush.bf16.msra.mxu0 %v1190
    %1656 = vmatpush.bf16.msra.mxu0 %v1186
    %1657 = vmatpush.bf16.msra.mxu0 %v1182
    %1658 = vmatpush.bf16.msra.mxu0 %v1178
    %1659 = vmatpush.bf16.msra.mxu0 %v1174
    %1660 = vmatpush.bf16.msra.mxu0 %v1170
    %1661 = vmatpush.bf16.msra.mxu0 %v1166
    %1662 = vmatpush.bf16.msra.mxu0 %v1162
    %1663 = vmatmul.bf16.gmra.mxu0 %v89
    %v1664 = vpop.f32.mrf.mxu0
    %v1665 = vadd.f32 %v1652, %v1664
    %v1666 = vpop.f32.mrf.mxu0
    %1667 = vdwg.mxu0
    %1668 = vmatpush.bf16.msra.mxu0 %v1222
    %1669 = vmatpush.bf16.msra.mxu0 %v1218
    %1670 = vmatpush.bf16.msra.mxu0 %v1214
    %1671 = vmatpush.bf16.msra.mxu0 %v1210
    %1672 = vmatpush.bf16.msra.mxu0 %v1206
    %1673 = vmatpush.bf16.msra.mxu0 %v1202
    %1674 = vmatpush.bf16.msra.mxu0 %v1198
    %1675 = vmatpush.bf16.msra.mxu0 %v1194
    %1676 = vmatmul.bf16.gmra.mxu0 %v90
    %v1677 = vpop.f32.mrf.mxu0
    %v1678 = vadd.f32 %v1665, %v1677
    %v1679 = vpop.f32.mrf.mxu0
    %1680 = vdwg.mxu0
    %1681 = vmatpush.bf16.msra.mxu0 %v1254
    %1682 = vmatpush.bf16.msra.mxu0 %v1250
    %1683 = vmatpush.bf16.msra.mxu0 %v1246
    %1684 = vmatpush.bf16.msra.mxu0 %v1242
    %1685 = vmatpush.bf16.msra.mxu0 %v1238
    %1686 = vmatpush.bf16.msra.mxu0 %v1234
    %1687 = vmatpush.bf16.msra.mxu0 %v1230
    %1688 = vmatpush.bf16.msra.mxu0 %v1226
    %1689 = vmatmul.bf16.gmra.mxu0 %v91
    %v1690 = vpop.f32.mrf.mxu0
    %v1691 = vadd.f32 %v1678, %v1690
    %v1692 = vpop.f32.mrf.mxu0
    %1693 = vdwg.mxu0
    %1694 = vmatpush.bf16.msra.mxu0 %v1286
    %1695 = vmatpush.bf16.msra.mxu0 %v1282
    %1696 = vmatpush.bf16.msra.mxu0 %v1278
    %1697 = vmatpush.bf16.msra.mxu0 %v1274
    %1698 = vmatpush.bf16.msra.mxu0 %v1270
    %1699 = vmatpush.bf16.msra.mxu0 %v1266
    %1700 = vmatpush.bf16.msra.mxu0 %v1262
    %1701 = vmatpush.bf16.msra.mxu0 %v1258
    %1702 = vmatmul.bf16.gmra.mxu0 %v92
    %v1703 = vpop.f32.mrf.mxu0
    %v1704 = vadd.f32 %v1691, %v1703
    %v1705 = vpop.f32.mrf.mxu0
    %1706 = vdwg.mxu0
    %1707 = vmatpush.bf16.msra.mxu0 %v1318
    %1708 = vmatpush.bf16.msra.mxu0 %v1314
    %1709 = vmatpush.bf16.msra.mxu0 %v1310
    %1710 = vmatpush.bf16.msra.mxu0 %v1306
    %1711 = vmatpush.bf16.msra.mxu0 %v1302
    %1712 = vmatpush.bf16.msra.mxu0 %v1298
    %1713 = vmatpush.bf16.msra.mxu0 %v1294
    %1714 = vmatpush.bf16.msra.mxu0 %v1290
    %1715 = vmatmul.bf16.gmra.mxu0 %v93
    %v1716 = vpop.f32.mrf.mxu0
    %v1717 = vadd.f32 %v1704, %v1716
    %v1718 = vpop.f32.mrf.mxu0
    %1719 = vdwg.mxu0
    %1720 = vmatpush.bf16.msra.mxu0 %v1350
    %1721 = vmatpush.bf16.msra.mxu0 %v1346
    %1722 = vmatpush.bf16.msra.mxu0 %v1342
    %1723 = vmatpush.bf16.msra.mxu0 %v1338
    %1724 = vmatpush.bf16.msra.mxu0 %v1334
    %1725 = vmatpush.bf16.msra.mxu0 %v1330
    %1726 = vmatpush.bf16.msra.mxu0 %v1326
    %1727 = vmatpush.bf16.msra.mxu0 %v1322
    %1728 = vmatmul.bf16.gmra.mxu0 %v94
    %v1729 = vpop.f32.mrf.mxu0
    %v1730 = vadd.f32 %v1717, %v1729
    %v1731 = vpop.f32.mrf.mxu0
    %1732 = vdwg.mxu0
    %1733 = vmatpush.bf16.msra.mxu0 %v1382
    %1734 = vmatpush.bf16.msra.mxu0 %v1378
    %1735 = vmatpush.bf16.msra.mxu0 %v1374
    %1736 = vmatpush.bf16.msra.mxu0 %v1370
    %1737 = vmatpush.bf16.msra.mxu0 %v1366
    %1738 = vmatpush.bf16.msra.mxu0 %v1362
    %1739 = vmatpush.bf16.msra.mxu0 %v1358
    %1740 = vmatpush.bf16.msra.mxu0 %v1354
    %1741 = vmatmul.bf16.gmra.mxu0 %v95
    %v1742 = vpop.f32.mrf.mxu0
    %v1743 = vadd.f32 %v1730, %v1742
    %v1744 = vpop.f32.mrf.mxu0
    %1745 = vdwg.mxu0
    %1746 = vmatpush.bf16.msra.mxu0 %v1159
    %1747 = vmatpush.bf16.msra.mxu0 %v1155
    %1748 = vmatpush.bf16.msra.mxu0 %v1151
    %1749 = vmatpush.bf16.msra.mxu0 %v1147
    %1750 = vmatpush.bf16.msra.mxu0 %v1143
    %1751 = vmatpush.bf16.msra.mxu0 %v1139
    %1752 = vmatpush.bf16.msra.mxu0 %v1135
    %1753 = vmatpush.bf16.msra.mxu0 %v1131
    %1754 = vmatmul.bf16.gmra.mxu0 %v88
    %v1755 = vpop.f32.mrf.mxu0
    %v1756 = vadd.f32 %v355, %v1755
    %v1757 = vpop.f32.mrf.mxu0
    %1758 = vdwg.mxu0
    %1759 = vmatpush.bf16.msra.mxu0 %v1191
    %1760 = vmatpush.bf16.msra.mxu0 %v1187
    %1761 = vmatpush.bf16.msra.mxu0 %v1183
    %1762 = vmatpush.bf16.msra.mxu0 %v1179
    %1763 = vmatpush.bf16.msra.mxu0 %v1175
    %1764 = vmatpush.bf16.msra.mxu0 %v1171
    %1765 = vmatpush.bf16.msra.mxu0 %v1167
    %1766 = vmatpush.bf16.msra.mxu0 %v1163
    %1767 = vmatmul.bf16.gmra.mxu0 %v89
    %v1768 = vpop.f32.mrf.mxu0
    %v1769 = vadd.f32 %v1756, %v1768
    %v1770 = vpop.f32.mrf.mxu0
    %1771 = vdwg.mxu0
    %1772 = vmatpush.bf16.msra.mxu0 %v1223
    %1773 = vmatpush.bf16.msra.mxu0 %v1219
    %1774 = vmatpush.bf16.msra.mxu0 %v1215
    %1775 = vmatpush.bf16.msra.mxu0 %v1211
    %1776 = vmatpush.bf16.msra.mxu0 %v1207
    %1777 = vmatpush.bf16.msra.mxu0 %v1203
    %1778 = vmatpush.bf16.msra.mxu0 %v1199
    %1779 = vmatpush.bf16.msra.mxu0 %v1195
    %1780 = vmatmul.bf16.gmra.mxu0 %v90
    %v1781 = vpop.f32.mrf.mxu0
    %v1782 = vadd.f32 %v1769, %v1781
    %v1783 = vpop.f32.mrf.mxu0
    %1784 = vdwg.mxu0
    %1785 = vmatpush.bf16.msra.mxu0 %v1255
    %1786 = vmatpush.bf16.msra.mxu0 %v1251
    %1787 = vmatpush.bf16.msra.mxu0 %v1247
    %1788 = vmatpush.bf16.msra.mxu0 %v1243
    %1789 = vmatpush.bf16.msra.mxu0 %v1239
    %1790 = vmatpush.bf16.msra.mxu0 %v1235
    %1791 = vmatpush.bf16.msra.mxu0 %v1231
    %1792 = vmatpush.bf16.msra.mxu0 %v1227
    %1793 = vmatmul.bf16.gmra.mxu0 %v91
    %v1794 = vpop.f32.mrf.mxu0
    %v1795 = vadd.f32 %v1782, %v1794
    %v1796 = vpop.f32.mrf.mxu0
    %1797 = vdwg.mxu0
    %1798 = vmatpush.bf16.msra.mxu0 %v1287
    %1799 = vmatpush.bf16.msra.mxu0 %v1283
    %1800 = vmatpush.bf16.msra.mxu0 %v1279
    %1801 = vmatpush.bf16.msra.mxu0 %v1275
    %1802 = vmatpush.bf16.msra.mxu0 %v1271
    %1803 = vmatpush.bf16.msra.mxu0 %v1267
    %1804 = vmatpush.bf16.msra.mxu0 %v1263
    %1805 = vmatpush.bf16.msra.mxu0 %v1259
    %1806 = vmatmul.bf16.gmra.mxu0 %v92
    %v1807 = vpop.f32.mrf.mxu0
    %v1808 = vadd.f32 %v1795, %v1807
    %v1809 = vpop.f32.mrf.mxu0
    %1810 = vdwg.mxu0
    %1811 = vmatpush.bf16.msra.mxu0 %v1319
    %1812 = vmatpush.bf16.msra.mxu0 %v1315
    %1813 = vmatpush.bf16.msra.mxu0 %v1311
    %1814 = vmatpush.bf16.msra.mxu0 %v1307
    %1815 = vmatpush.bf16.msra.mxu0 %v1303
    %1816 = vmatpush.bf16.msra.mxu0 %v1299
    %1817 = vmatpush.bf16.msra.mxu0 %v1295
    %1818 = vmatpush.bf16.msra.mxu0 %v1291
    %1819 = vmatmul.bf16.gmra.mxu0 %v93
    %v1820 = vpop.f32.mrf.mxu0
    %v1821 = vadd.f32 %v1808, %v1820
    %v1822 = vpop.f32.mrf.mxu0
    %1823 = vdwg.mxu0
    %1824 = vmatpush.bf16.msra.mxu0 %v1351
    %1825 = vmatpush.bf16.msra.mxu0 %v1347
    %1826 = vmatpush.bf16.msra.mxu0 %v1343
    %1827 = vmatpush.bf16.msra.mxu0 %v1339
    %1828 = vmatpush.bf16.msra.mxu0 %v1335
    %1829 = vmatpush.bf16.msra.mxu0 %v1331
    %1830 = vmatpush.bf16.msra.mxu0 %v1327
    %1831 = vmatpush.bf16.msra.mxu0 %v1323
    %1832 = vmatmul.bf16.gmra.mxu0 %v94
    %v1833 = vpop.f32.mrf.mxu0
    %v1834 = vadd.f32 %v1821, %v1833
    %v1835 = vpop.f32.mrf.mxu0
    %1836 = vdwg.mxu0
    %1837 = vmatpush.bf16.msra.mxu0 %v1383
    %1838 = vmatpush.bf16.msra.mxu0 %v1379
    %1839 = vmatpush.bf16.msra.mxu0 %v1375
    %1840 = vmatpush.bf16.msra.mxu0 %v1371
    %1841 = vmatpush.bf16.msra.mxu0 %v1367
    %1842 = vmatpush.bf16.msra.mxu0 %v1363
    %1843 = vmatpush.bf16.msra.mxu0 %v1359
    %1844 = vmatpush.bf16.msra.mxu0 %v1355
    %1845 = vmatmul.bf16.gmra.mxu0 %v95
    %v1846 = vpop.f32.mrf.mxu0
    %v1847 = vadd.f32 %v1834, %v1846
    %v1848 = vpop.f32.mrf.mxu0
    %1849 = vdwg.mxu0
    %1850 = vmatpush.bf16.msra.mxu0 %v1160
    %1851 = vmatpush.bf16.msra.mxu0 %v1156
    %1852 = vmatpush.bf16.msra.mxu0 %v1152
    %1853 = vmatpush.bf16.msra.mxu0 %v1148
    %1854 = vmatpush.bf16.msra.mxu0 %v1144
    %1855 = vmatpush.bf16.msra.mxu0 %v1140
    %1856 = vmatpush.bf16.msra.mxu0 %v1136
    %1857 = vmatpush.bf16.msra.mxu0 %v1132
    %1858 = vmatmul.bf16.gmra.mxu0 %v88
    %v1859 = vpop.f32.mrf.mxu0
    %v1860 = vadd.f32 %v356, %v1859
    %v1861 = vpop.f32.mrf.mxu0
    %1862 = vdwg.mxu0
    %1863 = vmatpush.bf16.msra.mxu0 %v1192
    %1864 = vmatpush.bf16.msra.mxu0 %v1188
    %1865 = vmatpush.bf16.msra.mxu0 %v1184
    %1866 = vmatpush.bf16.msra.mxu0 %v1180
    %1867 = vmatpush.bf16.msra.mxu0 %v1176
    %1868 = vmatpush.bf16.msra.mxu0 %v1172
    %1869 = vmatpush.bf16.msra.mxu0 %v1168
    %1870 = vmatpush.bf16.msra.mxu0 %v1164
    %1871 = vmatmul.bf16.gmra.mxu0 %v89
    %v1872 = vpop.f32.mrf.mxu0
    %v1873 = vadd.f32 %v1860, %v1872
    %v1874 = vpop.f32.mrf.mxu0
    %1875 = vdwg.mxu0
    %1876 = vmatpush.bf16.msra.mxu0 %v1224
    %1877 = vmatpush.bf16.msra.mxu0 %v1220
    %1878 = vmatpush.bf16.msra.mxu0 %v1216
    %1879 = vmatpush.bf16.msra.mxu0 %v1212
    %1880 = vmatpush.bf16.msra.mxu0 %v1208
    %1881 = vmatpush.bf16.msra.mxu0 %v1204
    %1882 = vmatpush.bf16.msra.mxu0 %v1200
    %1883 = vmatpush.bf16.msra.mxu0 %v1196
    %1884 = vmatmul.bf16.gmra.mxu0 %v90
    %v1885 = vpop.f32.mrf.mxu0
    %v1886 = vadd.f32 %v1873, %v1885
    %v1887 = vpop.f32.mrf.mxu0
    %1888 = vdwg.mxu0
    %1889 = vmatpush.bf16.msra.mxu0 %v1256
    %1890 = vmatpush.bf16.msra.mxu0 %v1252
    %1891 = vmatpush.bf16.msra.mxu0 %v1248
    %1892 = vmatpush.bf16.msra.mxu0 %v1244
    %1893 = vmatpush.bf16.msra.mxu0 %v1240
    %1894 = vmatpush.bf16.msra.mxu0 %v1236
    %1895 = vmatpush.bf16.msra.mxu0 %v1232
    %1896 = vmatpush.bf16.msra.mxu0 %v1228
    %1897 = vmatmul.bf16.gmra.mxu0 %v91
    %v1898 = vpop.f32.mrf.mxu0
    %v1899 = vadd.f32 %v1886, %v1898
    %v1900 = vpop.f32.mrf.mxu0
    %1901 = vdwg.mxu0
    %1902 = vmatpush.bf16.msra.mxu0 %v1288
    %1903 = vmatpush.bf16.msra.mxu0 %v1284
    %1904 = vmatpush.bf16.msra.mxu0 %v1280
    %1905 = vmatpush.bf16.msra.mxu0 %v1276
    %1906 = vmatpush.bf16.msra.mxu0 %v1272
    %1907 = vmatpush.bf16.msra.mxu0 %v1268
    %1908 = vmatpush.bf16.msra.mxu0 %v1264
    %1909 = vmatpush.bf16.msra.mxu0 %v1260
    %1910 = vmatmul.bf16.gmra.mxu0 %v92
    %v1911 = vpop.f32.mrf.mxu0
    %v1912 = vadd.f32 %v1899, %v1911
    %v1913 = vpop.f32.mrf.mxu0
    %1914 = vdwg.mxu0
    %1915 = vmatpush.bf16.msra.mxu0 %v1320
    %1916 = vmatpush.bf16.msra.mxu0 %v1316
    %1917 = vmatpush.bf16.msra.mxu0 %v1312
    %1918 = vmatpush.bf16.msra.mxu0 %v1308
    %1919 = vmatpush.bf16.msra.mxu0 %v1304
    %1920 = vmatpush.bf16.msra.mxu0 %v1300
    %1921 = vmatpush.bf16.msra.mxu0 %v1296
    %1922 = vmatpush.bf16.msra.mxu0 %v1292
    %1923 = vmatmul.bf16.gmra.mxu0 %v93
    %v1924 = vpop.f32.mrf.mxu0
    %v1925 = vadd.f32 %v1912, %v1924
    %v1926 = vpop.f32.mrf.mxu0
    %1927 = vdwg.mxu0
    %1928 = vmatpush.bf16.msra.mxu0 %v1352
    %1929 = vmatpush.bf16.msra.mxu0 %v1348
    %1930 = vmatpush.bf16.msra.mxu0 %v1344
    %1931 = vmatpush.bf16.msra.mxu0 %v1340
    %1932 = vmatpush.bf16.msra.mxu0 %v1336
    %1933 = vmatpush.bf16.msra.mxu0 %v1332
    %1934 = vmatpush.bf16.msra.mxu0 %v1328
    %1935 = vmatpush.bf16.msra.mxu0 %v1324
    %1936 = vmatmul.bf16.gmra.mxu0 %v94
    %v1937 = vpop.f32.mrf.mxu0
    %v1938 = vadd.f32 %v1925, %v1937
    %v1939 = vpop.f32.mrf.mxu0
    %1940 = vdwg.mxu0
    %1941 = vmatpush.bf16.msra.mxu0 %v1384
    %1942 = vmatpush.bf16.msra.mxu0 %v1380
    %1943 = vmatpush.bf16.msra.mxu0 %v1376
    %1944 = vmatpush.bf16.msra.mxu0 %v1372
    %1945 = vmatpush.bf16.msra.mxu0 %v1368
    %1946 = vmatpush.bf16.msra.mxu0 %v1364
    %1947 = vmatpush.bf16.msra.mxu0 %v1360
    %1948 = vmatpush.bf16.msra.mxu0 %v1356
    %1949 = vmatmul.bf16.gmra.mxu0 %v95
    %v1950 = vpop.f32.mrf.mxu0
    %v1951 = vadd.f32 %v1938, %v1950
    %v1952 = vpop.f32.mrf.mxu0
    %1953 = vdwg.mxu0
    %1954 = vmatpush.bf16.msra.mxu0 %v1161
    %1955 = vmatpush.bf16.msra.mxu0 %v1157
    %1956 = vmatpush.bf16.msra.mxu0 %v1153
    %1957 = vmatpush.bf16.msra.mxu0 %v1149
    %1958 = vmatpush.bf16.msra.mxu0 %v1145
    %1959 = vmatpush.bf16.msra.mxu0 %v1141
    %1960 = vmatpush.bf16.msra.mxu0 %v1137
    %1961 = vmatpush.bf16.msra.mxu0 %v1133
    %1962 = vmatmul.bf16.gmra.mxu0 %v88
    %v1963 = vpop.f32.mrf.mxu0
    %v1964 = vadd.f32 %v357, %v1963
    %v1965 = vpop.f32.mrf.mxu0
    %1966 = vdwg.mxu0
    %1967 = vmatpush.bf16.msra.mxu0 %v1193
    %1968 = vmatpush.bf16.msra.mxu0 %v1189
    %1969 = vmatpush.bf16.msra.mxu0 %v1185
    %1970 = vmatpush.bf16.msra.mxu0 %v1181
    %1971 = vmatpush.bf16.msra.mxu0 %v1177
    %1972 = vmatpush.bf16.msra.mxu0 %v1173
    %1973 = vmatpush.bf16.msra.mxu0 %v1169
    %1974 = vmatpush.bf16.msra.mxu0 %v1165
    %1975 = vmatmul.bf16.gmra.mxu0 %v89
    %v1976 = vpop.f32.mrf.mxu0
    %v1977 = vadd.f32 %v1964, %v1976
    %v1978 = vpop.f32.mrf.mxu0
    %1979 = vdwg.mxu0
    %1980 = vmatpush.bf16.msra.mxu0 %v1225
    %1981 = vmatpush.bf16.msra.mxu0 %v1221
    %1982 = vmatpush.bf16.msra.mxu0 %v1217
    %1983 = vmatpush.bf16.msra.mxu0 %v1213
    %1984 = vmatpush.bf16.msra.mxu0 %v1209
    %1985 = vmatpush.bf16.msra.mxu0 %v1205
    %1986 = vmatpush.bf16.msra.mxu0 %v1201
    %1987 = vmatpush.bf16.msra.mxu0 %v1197
    %1988 = vmatmul.bf16.gmra.mxu0 %v90
    %v1989 = vpop.f32.mrf.mxu0
    %v1990 = vadd.f32 %v1977, %v1989
    %v1991 = vpop.f32.mrf.mxu0
    %1992 = vdwg.mxu0
    %1993 = vmatpush.bf16.msra.mxu0 %v1257
    %1994 = vmatpush.bf16.msra.mxu0 %v1253
    %1995 = vmatpush.bf16.msra.mxu0 %v1249
    %1996 = vmatpush.bf16.msra.mxu0 %v1245
    %1997 = vmatpush.bf16.msra.mxu0 %v1241
    %1998 = vmatpush.bf16.msra.mxu0 %v1237
    %1999 = vmatpush.bf16.msra.mxu0 %v1233
    %2000 = vmatpush.bf16.msra.mxu0 %v1229
    %2001 = vmatmul.bf16.gmra.mxu0 %v91
    %v2002 = vpop.f32.mrf.mxu0
    %v2003 = vadd.f32 %v1990, %v2002
    %v2004 = vpop.f32.mrf.mxu0
    %2005 = vdwg.mxu0
    %2006 = vmatpush.bf16.msra.mxu0 %v1289
    %2007 = vmatpush.bf16.msra.mxu0 %v1285
    %2008 = vmatpush.bf16.msra.mxu0 %v1281
    %2009 = vmatpush.bf16.msra.mxu0 %v1277
    %2010 = vmatpush.bf16.msra.mxu0 %v1273
    %2011 = vmatpush.bf16.msra.mxu0 %v1269
    %2012 = vmatpush.bf16.msra.mxu0 %v1265
    %2013 = vmatpush.bf16.msra.mxu0 %v1261
    %2014 = vmatmul.bf16.gmra.mxu0 %v92
    %v2015 = vpop.f32.mrf.mxu0
    %v2016 = vadd.f32 %v2003, %v2015
    %v2017 = vpop.f32.mrf.mxu0
    %2018 = vdwg.mxu0
    %2019 = vmatpush.bf16.msra.mxu0 %v1321
    %2020 = vmatpush.bf16.msra.mxu0 %v1317
    %2021 = vmatpush.bf16.msra.mxu0 %v1313
    %2022 = vmatpush.bf16.msra.mxu0 %v1309
    %2023 = vmatpush.bf16.msra.mxu0 %v1305
    %2024 = vmatpush.bf16.msra.mxu0 %v1301
    %2025 = vmatpush.bf16.msra.mxu0 %v1297
    %2026 = vmatpush.bf16.msra.mxu0 %v1293
    %2027 = vmatmul.bf16.gmra.mxu0 %v93
    %v2028 = vpop.f32.mrf.mxu0
    %v2029 = vadd.f32 %v2016, %v2028
    %v2030 = vpop.f32.mrf.mxu0
    %2031 = vdwg.mxu0
    %2032 = vmatpush.bf16.msra.mxu0 %v1353
    %2033 = vmatpush.bf16.msra.mxu0 %v1349
    %2034 = vmatpush.bf16.msra.mxu0 %v1345
    %2035 = vmatpush.bf16.msra.mxu0 %v1341
    %2036 = vmatpush.bf16.msra.mxu0 %v1337
    %2037 = vmatpush.bf16.msra.mxu0 %v1333
    %2038 = vmatpush.bf16.msra.mxu0 %v1329
    %2039 = vmatpush.bf16.msra.mxu0 %v1325
    %2040 = vmatmul.bf16.gmra.mxu0 %v94
    %v2041 = vpop.f32.mrf.mxu0
    %v2042 = vadd.f32 %v2029, %v2041
    %v2043 = vpop.f32.mrf.mxu0
    %2044 = vdwg.mxu0
    %2045 = vmatpush.bf16.msra.mxu0 %v1385
    %2046 = vmatpush.bf16.msra.mxu0 %v1381
    %2047 = vmatpush.bf16.msra.mxu0 %v1377
    %2048 = vmatpush.bf16.msra.mxu0 %v1373
    %2049 = vmatpush.bf16.msra.mxu0 %v1369
    %2050 = vmatpush.bf16.msra.mxu0 %v1365
    %2051 = vmatpush.bf16.msra.mxu0 %v1361
    %2052 = vmatpush.bf16.msra.mxu0 %v1357
    %2053 = vmatmul.bf16.gmra.mxu0 %v95
    %v2054 = vpop.f32.mrf.mxu0
    %v2055 = vadd.f32 %v2042, %v2054
    %v2056 = vpop.f32.mrf.mxu0
    %2057 = vdwg.mxu0
    %vm2058 = vcmp.gt.f32.partialorder %v1743, 0.0
    %vm2059 = vcmp.gt.f32.partialorder %v1847, 0.0
    %vm2060 = vcmp.gt.f32.partialorder %v1951, 0.0
    %vm2061 = vcmp.gt.f32.partialorder %v2055, 0.0
    %v2062 = vmul.f32 %v1743, 0.01
    %v2063 = vmul.f32 %v1847, 0.01
    %v2064 = vmul.f32 %v1951, 0.01
    %v2065 = vmul.f32 %v2055, 0.01
    %v2066 = vsel %vm2058, %v1743, %v2062
    %v2067 = vsel %vm2059, %v1847, %v2063
    %v2068 = vsel %vm2060, %v1951, %v2064
    %v2069 = vsel %vm2061, %v2055, %v2065
    %v2070 = vpack.c.bf16 %v2066, %v2066
    %v2071 = vpack.c.bf16 %v2067, %v2067
    %v2072 = vpack.c.bf16 %v2068, %v2068
    %v2073 = vpack.c.bf16 %v2069, %v2069
    %v2074 = vld [vmem:[#allocation8] sm:$0xff]
    %v2075 = vld [vmem:[#allocation8 + $0x8] sm:$0xff]
    %v2076 = vld [vmem:[#allocation8 + $0x10] sm:$0xff]
    %v2077 = vld [vmem:[#allocation8 + $0x18] sm:$0xff]
    %v2078 = vld [vmem:[#allocation8 + $0x20] sm:$0xff]
    %v2079 = vld [vmem:[#allocation8 + $0x28] sm:$0xff]
    %v2080 = vld [vmem:[#allocation8 + $0x30] sm:$0xff]
    %v2081 = vld [vmem:[#allocation8 + $0x38] sm:$0xff]
    %v2082 = vld [vmem:[#allocation8 + $0x40] sm:$0xff]
    %v2083 = vld [vmem:[#allocation8 + $0x48] sm:$0xff]
    %v2084 = vld [vmem:[#allocation8 + $0x50] sm:$0xff]
    %v2085 = vld [vmem:[#allocation8 + $0x58] sm:$0xff]
    %v2086 = vld [vmem:[#allocation8 + $0x60] sm:$0xff]
    %v2087 = vld [vmem:[#allocation8 + $0x68] sm:$0xff]
    %v2088 = vld [vmem:[#allocation8 + $0x70] sm:$0xff]
    %v2089 = vld [vmem:[#allocation8 + $0x78] sm:$0xff]
    %v2090 = vld [vmem:[#allocation8 + $0x80] sm:$0xff]
    %v2091 = vld [vmem:[#allocation8 + $0x88] sm:$0xff]
    %v2092 = vld [vmem:[#allocation8 + $0x90] sm:$0xff]
    %v2093 = vld [vmem:[#allocation8 + $0x98] sm:$0xff]
    %v2094 = vld [vmem:[#allocation8 + $0xa0] sm:$0xff]
    %v2095 = vld [vmem:[#allocation8 + $0xa8] sm:$0xff]
    %v2096 = vld [vmem:[#allocation8 + $0xb0] sm:$0xff]
    %v2097 = vld [vmem:[#allocation8 + $0xb8] sm:$0xff]
    %v2098 = vld [vmem:[#allocation8 + $0xc0] sm:$0xff]
    %v2099 = vld [vmem:[#allocation8 + $0xc8] sm:$0xff]
    %v2100 = vld [vmem:[#allocation8 + $0xd0] sm:$0xff]
    %v2101 = vld [vmem:[#allocation8 + $0xd8] sm:$0xff]
    %v2102 = vld [vmem:[#allocation8 + $0xe0] sm:$0xff]
    %v2103 = vld [vmem:[#allocation8 + $0xe8] sm:$0xff]
    %v2104 = vld [vmem:[#allocation8 + $0xf0] sm:$0xff]
    %v2105 = vld [vmem:[#allocation8 + $0xf8] sm:$0xff]
    %v2106 = vld [vmem:[#allocation8 + $0x100] sm:$0xff]
    %v2107 = vld [vmem:[#allocation8 + $0x108] sm:$0xff]
    %v2108 = vld [vmem:[#allocation8 + $0x110] sm:$0xff]
    %v2109 = vld [vmem:[#allocation8 + $0x118] sm:$0xff]
    %v2110 = vld [vmem:[#allocation8 + $0x120] sm:$0xff]
    %v2111 = vld [vmem:[#allocation8 + $0x128] sm:$0xff]
    %v2112 = vld [vmem:[#allocation8 + $0x130] sm:$0xff]
    %v2113 = vld [vmem:[#allocation8 + $0x138] sm:$0xff]
    %v2114 = vld [vmem:[#allocation8 + $0x140] sm:$0xff]
    %v2115 = vld [vmem:[#allocation8 + $0x148] sm:$0xff]
    %v2116 = vld [vmem:[#allocation8 + $0x150] sm:$0xff]
    %v2117 = vld [vmem:[#allocation8 + $0x158] sm:$0xff]
    %v2118 = vld [vmem:[#allocation8 + $0x160] sm:$0xff]
    %v2119 = vld [vmem:[#allocation8 + $0x168] sm:$0xff]
    %v2120 = vld [vmem:[#allocation8 + $0x170] sm:$0xff]
    %v2121 = vld [vmem:[#allocation8 + $0x178] sm:$0xff]
    %v2122 = vld [vmem:[#allocation8 + $0x180] sm:$0xff]
    %v2123 = vld [vmem:[#allocation8 + $0x188] sm:$0xff]
    %v2124 = vld [vmem:[#allocation8 + $0x190] sm:$0xff]
    %v2125 = vld [vmem:[#allocation8 + $0x198] sm:$0xff]
    %v2126 = vld [vmem:[#allocation8 + $0x1a0] sm:$0xff]
    %v2127 = vld [vmem:[#allocation8 + $0x1a8] sm:$0xff]
    %v2128 = vld [vmem:[#allocation8 + $0x1b0] sm:$0xff]
    %v2129 = vld [vmem:[#allocation8 + $0x1b8] sm:$0xff]
    %v2130 = vld [vmem:[#allocation8 + $0x1c0] sm:$0xff]
    %v2131 = vld [vmem:[#allocation8 + $0x1c8] sm:$0xff]
    %v2132 = vld [vmem:[#allocation8 + $0x1d0] sm:$0xff]
    %v2133 = vld [vmem:[#allocation8 + $0x1d8] sm:$0xff]
    %v2134 = vld [vmem:[#allocation8 + $0x1e0] sm:$0xff]
    %v2135 = vld [vmem:[#allocation8 + $0x1e8] sm:$0xff]
    %v2136 = vld [vmem:[#allocation8 + $0x1f0] sm:$0xff]
    %v2137 = vld [vmem:[#allocation8 + $0x1f8] sm:$0xff]
    %v2138 = vld [vmem:[%s4] sm:$0x3]
    %v2140 = vperm.slane %v2138, 0
    %v2141 = vperm.slane %v2138, 1
    %v2208 = vunpack.c.l.b16 %v2074
    %v2209 = vunpack.c.h.b16 %v2074
    %v2210 = vunpack.c.l.b16 %v2075
    %v2211 = vunpack.c.h.b16 %v2075
    %v2212 = vunpack.c.l.b16 %v2076
    %v2213 = vunpack.c.h.b16 %v2076
    %v2214 = vunpack.c.l.b16 %v2077
    %v2215 = vunpack.c.h.b16 %v2077
    %v2216 = vunpack.c.l.b16 %v2078
    %v2217 = vunpack.c.h.b16 %v2078
    %v2218 = vunpack.c.l.b16 %v2079
    %v2219 = vunpack.c.h.b16 %v2079
    %v2220 = vunpack.c.l.b16 %v2080
    %v2221 = vunpack.c.h.b16 %v2080
    %v2222 = vunpack.c.l.b16 %v2081
    %v2223 = vunpack.c.h.b16 %v2081
    %v2224 = vunpack.c.l.b16 %v2082
    %v2225 = vunpack.c.h.b16 %v2082
    %v2226 = vunpack.c.l.b16 %v2083
    %v2227 = vunpack.c.h.b16 %v2083
    %v2228 = vunpack.c.l.b16 %v2084
    %v2229 = vunpack.c.h.b16 %v2084
    %v2230 = vunpack.c.l.b16 %v2085
    %v2231 = vunpack.c.h.b16 %v2085
    %v2232 = vunpack.c.l.b16 %v2086
    %v2233 = vunpack.c.h.b16 %v2086
    %v2234 = vunpack.c.l.b16 %v2087
    %v2235 = vunpack.c.h.b16 %v2087
    %v2236 = vunpack.c.l.b16 %v2088
    %v2237 = vunpack.c.h.b16 %v2088
    %v2238 = vunpack.c.l.b16 %v2089
    %v2239 = vunpack.c.h.b16 %v2089
    %v2240 = vunpack.c.l.b16 %v2090
    %v2241 = vunpack.c.h.b16 %v2090
    %v2242 = vunpack.c.l.b16 %v2091
    %v2243 = vunpack.c.h.b16 %v2091
    %v2244 = vunpack.c.l.b16 %v2092
    %v2245 = vunpack.c.h.b16 %v2092
    %v2246 = vunpack.c.l.b16 %v2093
    %v2247 = vunpack.c.h.b16 %v2093
    %v2248 = vunpack.c.l.b16 %v2094
    %v2249 = vunpack.c.h.b16 %v2094
    %v2250 = vunpack.c.l.b16 %v2095
    %v2251 = vunpack.c.h.b16 %v2095
    %v2252 = vunpack.c.l.b16 %v2096
    %v2253 = vunpack.c.h.b16 %v2096
    %v2254 = vunpack.c.l.b16 %v2097
    %v2255 = vunpack.c.h.b16 %v2097
    %v2256 = vunpack.c.l.b16 %v2098
    %v2257 = vunpack.c.h.b16 %v2098
    %v2258 = vunpack.c.l.b16 %v2099
    %v2259 = vunpack.c.h.b16 %v2099
    %v2260 = vunpack.c.l.b16 %v2100
    %v2261 = vunpack.c.h.b16 %v2100
    %v2262 = vunpack.c.l.b16 %v2101
    %v2263 = vunpack.c.h.b16 %v2101
    %v2264 = vunpack.c.l.b16 %v2102
    %v2265 = vunpack.c.h.b16 %v2102
    %v2266 = vunpack.c.l.b16 %v2103
    %v2267 = vunpack.c.h.b16 %v2103
    %v2268 = vunpack.c.l.b16 %v2104
    %v2269 = vunpack.c.h.b16 %v2104
    %v2270 = vunpack.c.l.b16 %v2105
    %v2271 = vunpack.c.h.b16 %v2105
    %v2272 = vunpack.c.l.b16 %v2106
    %v2273 = vunpack.c.h.b16 %v2106
    %v2274 = vunpack.c.l.b16 %v2107
    %v2275 = vunpack.c.h.b16 %v2107
    %v2276 = vunpack.c.l.b16 %v2108
    %v2277 = vunpack.c.h.b16 %v2108
    %v2278 = vunpack.c.l.b16 %v2109
    %v2279 = vunpack.c.h.b16 %v2109
    %v2280 = vunpack.c.l.b16 %v2110
    %v2281 = vunpack.c.h.b16 %v2110
    %v2282 = vunpack.c.l.b16 %v2111
    %v2283 = vunpack.c.h.b16 %v2111
    %v2284 = vunpack.c.l.b16 %v2112
    %v2285 = vunpack.c.h.b16 %v2112
    %v2286 = vunpack.c.l.b16 %v2113
    %v2287 = vunpack.c.h.b16 %v2113
    %v2288 = vunpack.c.l.b16 %v2114
    %v2289 = vunpack.c.h.b16 %v2114
    %v2290 = vunpack.c.l.b16 %v2115
    %v2291 = vunpack.c.h.b16 %v2115
    %v2292 = vunpack.c.l.b16 %v2116
    %v2293 = vunpack.c.h.b16 %v2116
    %v2294 = vunpack.c.l.b16 %v2117
    %v2295 = vunpack.c.h.b16 %v2117
    %v2296 = vunpack.c.l.b16 %v2118
    %v2297 = vunpack.c.h.b16 %v2118
    %v2298 = vunpack.c.l.b16 %v2119
    %v2299 = vunpack.c.h.b16 %v2119
    %v2300 = vunpack.c.l.b16 %v2120
    %v2301 = vunpack.c.h.b16 %v2120
    %v2302 = vunpack.c.l.b16 %v2121
    %v2303 = vunpack.c.h.b16 %v2121
    %v2304 = vunpack.c.l.b16 %v2122
    %v2305 = vunpack.c.h.b16 %v2122
    %v2306 = vunpack.c.l.b16 %v2123
    %v2307 = vunpack.c.h.b16 %v2123
    %v2308 = vunpack.c.l.b16 %v2124
    %v2309 = vunpack.c.h.b16 %v2124
    %v2310 = vunpack.c.l.b16 %v2125
    %v2311 = vunpack.c.h.b16 %v2125
    %v2312 = vunpack.c.l.b16 %v2126
    %v2313 = vunpack.c.h.b16 %v2126
    %v2314 = vunpack.c.l.b16 %v2127
    %v2315 = vunpack.c.h.b16 %v2127
    %v2316 = vunpack.c.l.b16 %v2128
    %v2317 = vunpack.c.h.b16 %v2128
    %v2318 = vunpack.c.l.b16 %v2129
    %v2319 = vunpack.c.h.b16 %v2129
    %v2320 = vunpack.c.l.b16 %v2130
    %v2321 = vunpack.c.h.b16 %v2130
    %v2322 = vunpack.c.l.b16 %v2131
    %v2323 = vunpack.c.h.b16 %v2131
    %v2324 = vunpack.c.l.b16 %v2132
    %v2325 = vunpack.c.h.b16 %v2132
    %v2326 = vunpack.c.l.b16 %v2133
    %v2327 = vunpack.c.h.b16 %v2133
    %v2328 = vunpack.c.l.b16 %v2134
    %v2329 = vunpack.c.h.b16 %v2134
    %v2330 = vunpack.c.l.b16 %v2135
    %v2331 = vunpack.c.h.b16 %v2135
    %v2332 = vunpack.c.l.b16 %v2136
    %v2333 = vunpack.c.h.b16 %v2136
    %v2334 = vunpack.c.l.b16 %v2137
    %v2335 = vunpack.c.h.b16 %v2137
    %v2336 = vpack.c.b16 %v2210, %v2208
    %v2337 = vpack.c.b16 %v2211, %v2209
    %v2338 = vpack.c.b16 %v2214, %v2212
    %v2339 = vpack.c.b16 %v2215, %v2213
    %v2340 = vpack.c.b16 %v2218, %v2216
    %v2341 = vpack.c.b16 %v2219, %v2217
    %v2342 = vpack.c.b16 %v2222, %v2220
    %v2343 = vpack.c.b16 %v2223, %v2221
    %v2344 = vpack.c.b16 %v2226, %v2224
    %v2345 = vpack.c.b16 %v2227, %v2225
    %v2346 = vpack.c.b16 %v2230, %v2228
    %v2347 = vpack.c.b16 %v2231, %v2229
    %v2348 = vpack.c.b16 %v2234, %v2232
    %v2349 = vpack.c.b16 %v2235, %v2233
    %v2350 = vpack.c.b16 %v2238, %v2236
    %v2351 = vpack.c.b16 %v2239, %v2237
    %v2352 = vpack.c.b16 %v2242, %v2240
    %v2353 = vpack.c.b16 %v2243, %v2241
    %v2354 = vpack.c.b16 %v2246, %v2244
    %v2355 = vpack.c.b16 %v2247, %v2245
    %v2356 = vpack.c.b16 %v2250, %v2248
    %v2357 = vpack.c.b16 %v2251, %v2249
    %v2358 = vpack.c.b16 %v2254, %v2252
    %v2359 = vpack.c.b16 %v2255, %v2253
    %v2360 = vpack.c.b16 %v2258, %v2256
    %v2361 = vpack.c.b16 %v2259, %v2257
    %v2362 = vpack.c.b16 %v2262, %v2260
    %v2363 = vpack.c.b16 %v2263, %v2261
    %v2364 = vpack.c.b16 %v2266, %v2264
    %v2365 = vpack.c.b16 %v2267, %v2265
    %v2366 = vpack.c.b16 %v2270, %v2268
    %v2367 = vpack.c.b16 %v2271, %v2269
    %v2368 = vpack.c.b16 %v2274, %v2272
    %v2369 = vpack.c.b16 %v2275, %v2273
    %v2370 = vpack.c.b16 %v2278, %v2276
    %v2371 = vpack.c.b16 %v2279, %v2277
    %v2372 = vpack.c.b16 %v2282, %v2280
    %v2373 = vpack.c.b16 %v2283, %v2281
    %v2374 = vpack.c.b16 %v2286, %v2284
    %v2375 = vpack.c.b16 %v2287, %v2285
    %v2376 = vpack.c.b16 %v2290, %v2288
    %v2377 = vpack.c.b16 %v2291, %v2289
    %v2378 = vpack.c.b16 %v2294, %v2292
    %v2379 = vpack.c.b16 %v2295, %v2293
    %v2380 = vpack.c.b16 %v2298, %v2296
    %v2381 = vpack.c.b16 %v2299, %v2297
    %v2382 = vpack.c.b16 %v2302, %v2300
    %v2383 = vpack.c.b16 %v2303, %v2301
    %v2384 = vpack.c.b16 %v2306, %v2304
    %v2385 = vpack.c.b16 %v2307, %v2305
    %v2386 = vpack.c.b16 %v2310, %v2308
    %v2387 = vpack.c.b16 %v2311, %v2309
    %v2388 = vpack.c.b16 %v2314, %v2312
    %v2389 = vpack.c.b16 %v2315, %v2313
    %v2390 = vpack.c.b16 %v2318, %v2316
    %v2391 = vpack.c.b16 %v2319, %v2317
    %v2392 = vpack.c.b16 %v2322, %v2320
    %v2393 = vpack.c.b16 %v2323, %v2321
    %v2394 = vpack.c.b16 %v2326, %v2324
    %v2395 = vpack.c.b16 %v2327, %v2325
    %v2396 = vpack.c.b16 %v2330, %v2328
    %v2397 = vpack.c.b16 %v2331, %v2329
    %v2398 = vpack.c.b16 %v2334, %v2332
    %v2399 = vpack.c.b16 %v2335, %v2333
    %2464 = vmatpush.bf16.msra.mxu0 %v2350
    %2465 = vmatpush.bf16.msra.mxu0 %v2348
    %2466 = vmatpush.bf16.msra.mxu0 %v2346
    %2467 = vmatpush.bf16.msra.mxu0 %v2344
    %2468 = vmatpush.bf16.msra.mxu0 %v2342
    %2469 = vmatpush.bf16.msra.mxu0 %v2340
    %2470 = vmatpush.bf16.msra.mxu0 %v2338
    %2471 = vmatpush.bf16.msra.mxu0 %v2336
    %2472 = vmatmul.bf16.gmra.mxu0 %v2070
    %v2473 = vpop.f32.mrf.mxu0
    %v2474 = vadd.f32 %v2140, %v2473
    %v2475 = vpop.f32.mrf.mxu0
    %2476 = vdwg.mxu0
    %2477 = vmatpush.bf16.msra.mxu0 %v2366
    %2478 = vmatpush.bf16.msra.mxu0 %v2364
    %2479 = vmatpush.bf16.msra.mxu0 %v2362
    %2480 = vmatpush.bf16.msra.mxu0 %v2360
    %2481 = vmatpush.bf16.msra.mxu0 %v2358
    %2482 = vmatpush.bf16.msra.mxu0 %v2356
    %2483 = vmatpush.bf16.msra.mxu0 %v2354
    %2484 = vmatpush.bf16.msra.mxu0 %v2352
    %2485 = vmatmul.bf16.gmra.mxu0 %v2071
    %v2486 = vpop.f32.mrf.mxu0
    %v2487 = vadd.f32 %v2474, %v2486
    %v2488 = vpop.f32.mrf.mxu0
    %2489 = vdwg.mxu0
    %2490 = vmatpush.bf16.msra.mxu0 %v2382
    %2491 = vmatpush.bf16.msra.mxu0 %v2380
    %2492 = vmatpush.bf16.msra.mxu0 %v2378
    %2493 = vmatpush.bf16.msra.mxu0 %v2376
    %2494 = vmatpush.bf16.msra.mxu0 %v2374
    %2495 = vmatpush.bf16.msra.mxu0 %v2372
    %2496 = vmatpush.bf16.msra.mxu0 %v2370
    %2497 = vmatpush.bf16.msra.mxu0 %v2368
    %2498 = vmatmul.bf16.gmra.mxu0 %v2072
    %v2499 = vpop.f32.mrf.mxu0
    %v2500 = vadd.f32 %v2487, %v2499
    %v2501 = vpop.f32.mrf.mxu0
    %2502 = vdwg.mxu0
    %2503 = vmatpush.bf16.msra.mxu0 %v2398
    %2504 = vmatpush.bf16.msra.mxu0 %v2396
    %2505 = vmatpush.bf16.msra.mxu0 %v2394
    %2506 = vmatpush.bf16.msra.mxu0 %v2392
    %2507 = vmatpush.bf16.msra.mxu0 %v2390
    %2508 = vmatpush.bf16.msra.mxu0 %v2388
    %2509 = vmatpush.bf16.msra.mxu0 %v2386
    %2510 = vmatpush.bf16.msra.mxu0 %v2384
    %2511 = vmatmul.bf16.gmra.mxu0 %v2073
    %v2512 = vpop.f32.mrf.mxu0
    %v2513 = vadd.f32 %v2500, %v2512
    %v2514 = vpop.f32.mrf.mxu0
    %2515 = vdwg.mxu0
    %2516 = vmatpush.bf16.msra.mxu0 %v2351
    %2517 = vmatpush.bf16.msra.mxu0 %v2349
    %2518 = vmatpush.bf16.msra.mxu0 %v2347
    %2519 = vmatpush.bf16.msra.mxu0 %v2345
    %2520 = vmatpush.bf16.msra.mxu0 %v2343
    %2521 = vmatpush.bf16.msra.mxu0 %v2341
    %2522 = vmatpush.bf16.msra.mxu0 %v2339
    %2523 = vmatpush.bf16.msra.mxu0 %v2337
    %2524 = vmatmul.bf16.gmra.mxu0 %v2070
    %v2525 = vpop.f32.mrf.mxu0
    %v2526 = vadd.f32 %v2141, %v2525
    %v2527 = vpop.f32.mrf.mxu0
    %2528 = vdwg.mxu0
    %2529 = vmatpush.bf16.msra.mxu0 %v2367
    %2530 = vmatpush.bf16.msra.mxu0 %v2365
    %2531 = vmatpush.bf16.msra.mxu0 %v2363
    %2532 = vmatpush.bf16.msra.mxu0 %v2361
    %2533 = vmatpush.bf16.msra.mxu0 %v2359
    %2534 = vmatpush.bf16.msra.mxu0 %v2357
    %2535 = vmatpush.bf16.msra.mxu0 %v2355
    %2536 = vmatpush.bf16.msra.mxu0 %v2353
    %2537 = vmatmul.bf16.gmra.mxu0 %v2071
    %v2538 = vpop.f32.mrf.mxu0
    %v2539 = vadd.f32 %v2526, %v2538
    %v2540 = vpop.f32.mrf.mxu0
    %2541 = vdwg.mxu0
    %2542 = vmatpush.bf16.msra.mxu0 %v2383
    %2543 = vmatpush.bf16.msra.mxu0 %v2381
    %2544 = vmatpush.bf16.msra.mxu0 %v2379
    %2545 = vmatpush.bf16.msra.mxu0 %v2377
    %2546 = vmatpush.bf16.msra.mxu0 %v2375
    %2547 = vmatpush.bf16.msra.mxu0 %v2373
    %2548 = vmatpush.bf16.msra.mxu0 %v2371
    %2549 = vmatpush.bf16.msra.mxu0 %v2369
    %2550 = vmatmul.bf16.gmra.mxu0 %v2072
    %v2551 = vpop.f32.mrf.mxu0
    %v2552 = vadd.f32 %v2539, %v2551
    %v2553 = vpop.f32.mrf.mxu0
    %2554 = vdwg.mxu0
    %2555 = vmatpush.bf16.msra.mxu0 %v2399
    %2556 = vmatpush.bf16.msra.mxu0 %v2397
    %2557 = vmatpush.bf16.msra.mxu0 %v2395
    %2558 = vmatpush.bf16.msra.mxu0 %v2393
    %2559 = vmatpush.bf16.msra.mxu0 %v2391
    %2560 = vmatpush.bf16.msra.mxu0 %v2389
    %2561 = vmatpush.bf16.msra.mxu0 %v2387
    %2562 = vmatpush.bf16.msra.mxu0 %v2385
    %2563 = vmatmul.bf16.gmra.mxu0 %v2073
    %v2564 = vpop.f32.mrf.mxu0
    %v2565 = vadd.f32 %v2552, %v2564
    %v2566 = vpop.f32.mrf.mxu0
    %2567 = vdwg.mxu0
    %2568 = vst [vmem:[#allocation10] sm:$0xff] %v2513
    %2569 = vst [vmem:[#allocation10 + $0x8] sm:$0xff] %v2565
    // Predicated region
    $region38: #{tpu_custom_call.1} parent=1 // pred_check
      _
    $region39: #{tpu_custom_call.1} parent=1 // pred_check_branch
      %2571 = sbr.rel (0) target = $region41
    $region40: #{tpu_custom_call.1} parent=1 // pred_region
      %2573 = vsyncadd [#allocation4], 0
      %s2575 = sshll.u32 [#allocation10], 4
      %s2576 = int_to_ptr.vmem [resolvable:$true] %s2575
      %s2577 = sshll.u32 %s5, 4
      %s2578 = int_to_ptr.hbm [resolvable:$true] %s2577
      %2580 = dma.vmem_to_hbm [thread:$0]  %s2576, 256, %s2578, [#allocation4]
    $region41: #{tpu_custom_call.1} parent=1 // pred_fallthru
      _
    // Predicated region
    $region42: #{tpu_custom_call.1} parent=1 // pred_check
      _
    $region43: #{tpu_custom_call.1} parent=1 // pred_check_branch
      %2582 = sbr.rel (0) target = $region45
    $region44: #{tpu_custom_call.1} parent=1 // pred_region
      %2584 = dma.done [#allocation4], 256
    $region45: #{tpu_custom_call.1} parent=1 // pred_fallthru
      _
    %2585 = vsyncpa [#allocation3], 1
    %2586 = vsyncpa [#allocation6], 1
    %2587 = vsyncpa [#allocation9], 1
    %2588 = vsyncpa [#allocation4], 1

</llo_original>
